<compile_context>
chip_gen: v7x
topology: tpu7x:2x2x1
jax: 0.10.0
libtpu: 0.0.40
codegen_flags: <defaults>
</compile_context>

<pallas_src>
import math

import jax
import jax.numpy as jnp
from jax.experimental import pallas as pl
from jax.experimental.pallas import tpu as pltpu


def _leaky_relu(x, slope=0.2):
    return jnp.where(x > 0, x, slope * x)


def mnist_disc_kernel(x_ref, w1_ref, b1_ref, w2_ref, b2_ref, w3t_ref, b3_ref,
                      o_ref):
    # Layer 1: (tb, D)bf16 @ (D, 512)bf16 -> f32 acc; bias + activation in f32.
    x = x_ref[...].astype(jnp.bfloat16)
    h1 = jnp.dot(x, w1_ref[...],
                 preferred_element_type=jnp.float32) + b1_ref[...]
    h1 = _leaky_relu(h1)

    # Layer 2: (tb, 512)bf16 @ (512, 256)bf16 -> f32 acc.
    h2 = jnp.dot(h1.astype(jnp.bfloat16), w2_ref[...],
                 preferred_element_type=jnp.float32) + b2_ref[...]
    h2 = _leaky_relu(h2)

    # Layer 3: N=1 matmul replaced by per-lane multiply + cross-lane reduce
    # (VPU/XLU slots, MXU stays free).  w3 arrives transposed as (1, 256).
    w3 = w3t_ref[...].astype(jnp.float32)                 # (1, 256)
    h3 = jnp.sum(h2 * w3, axis=-1, keepdims=True) + b3_ref[0, 0]

    o_ref[...] = jax.nn.sigmoid(h3)


def _round_up(x, m):
    return ((x + m - 1) // m) * m


def _pick_batch_tile(B, batch_tile):
    # Small batches: a single full block (block dim == array dim, so the
    # (8, 128) divisibility rule does not apply).
    if B < 128:
        return B
    # Guarantee >= 2 grid steps so both v7x TensorCores get work; otherwise
    # use the largest 8-aligned tile <= batch_tile.
    half = _round_up((B + 1) // 2, 8)
    return max(8, min(batch_tile, half))


def mnist_discriminator(img, params, *, batch_tile=512):
    """img: (B, C, H, W) float32 or bfloat16. Returns (B, 1) validity in [0,1]."""
    B = img.shape[0]
    x = img.reshape(B, -1)                 # same as torch .view(B, -1)
    if x.dtype != jnp.bfloat16:
        x = x.astype(jnp.float32)
    D = x.shape[1]
    w1, b1, w2, b2, w3t, b3 = params

    tb = _pick_batch_tile(B, batch_tile)
    grid = (pl.cdiv(B, tb),)               # partial last block; no pad copy

    out = pl.pallas_call(
        mnist_disc_kernel,
        out_shape=jax.ShapeDtypeStruct((B, 1), jnp.float32),
        grid=grid,
        in_specs=[
            pl.BlockSpec((tb, D), lambda i: (i, 0)),            # x tile
            pl.BlockSpec((D, 512), lambda i: (0, 0)),           # w1 (bf16, resident)
            pl.BlockSpec((1, 512), lambda i: (0, 0)),           # b1 (f32)
            pl.BlockSpec((512, 256), lambda i: (0, 0)),         # w2 (bf16, resident)
            pl.BlockSpec((1, 256), lambda i: (0, 0)),           # b2 (f32)
            pl.BlockSpec((1, 256), lambda i: (0, 0)),           # w3^T (bf16)
            pl.BlockSpec(memory_space=pltpu.MemorySpace.SMEM),  # b3 scalar
        ],
        out_specs=pl.BlockSpec((tb, 1), lambda i: (i, 0)),
        compiler_params=pltpu.CompilerParams(
            dimension_semantics=("parallel",)),
    )(x, w1, b1, w2, b2, w3t, b3)
    return out


def init_params(key, in_features):
    """Deterministic synthetic parameters (PyTorch-Linear-like uniform init).

    w1, w2 are stored transposed (in, out) in bf16; w3 is stored as its
    PyTorch (out=1, in=256) shape, i.e. already the (1, 256) row the kernel
    wants, also bf16.  Biases stay f32; b3 is a (1, 1) SMEM scalar.
    """
    dims = [(in_features, 512), (512, 256), (256, 1)]
    params = []
    for li, (fan_in, fan_out) in enumerate(dims):
        key, kw, kb = jax.random.split(key, 3)
        bound = 1.0 / math.sqrt(fan_in)
        w = jax.random.uniform(kw, (fan_in, fan_out), jnp.float32,
                               minval=-bound, maxval=bound)
        b = jax.random.uniform(kb, (1, fan_out), jnp.float32,
                               minval=-bound, maxval=bound)
        if li == 2:  # last layer: keep w transposed as (1, 256)
            w = w.T
        params += [w.astype(jnp.bfloat16), b]
    return tuple(params)


def reference_forward(img, params, *, bf16_dots=True):
    """Plain-JAX reference. With bf16_dots=True it mirrors the kernel math."""
    B = img.shape[0]
    x = img.reshape(B, -1).astype(jnp.float32)
    w1, b1, w2, b2, w3t, b3 = params

    def dot(a, w):
        if bf16_dots:
            a = a.astype(jnp.bfloat16)
        else:
            w = w.astype(jnp.float32)
        return jnp.dot(a, w, preferred_element_type=jnp.float32)

    h = _leaky_relu(dot(x, w1) + b1)
    h = _leaky_relu(dot(h, w2) + b2)
    h3 = jnp.sum(h * w3t.astype(jnp.float32), axis=-1, keepdims=True) + b3
    return jax.nn.sigmoid(h3)


if __name__ == "__main__":
    key = jax.random.PRNGKey(0)
    k_img, k_par, k_img2 = jax.random.split(key, 3)

    # MNIST-like input: img_size=(1, 28, 28) -> 784 features.
    img_size = (1, 28, 28)
    params = init_params(k_par, math.prod(img_size))

    # 1) Small-batch path (single full block).
    B = 8
    img = jax.random.normal(k_img, (B,) + img_size, jnp.float32)
    validity = jax.block_until_ready(mnist_discriminator(img, params))
    assert validity.shape == (B, 1)
    ref_bf16 = reference_forward(img, params, bf16_dots=True)
    assert jnp.allclose(validity, ref_bf16, atol=1e-3, rtol=1e-3)
    ref_f32 = reference_forward(img, params, bf16_dots=False)
    assert jnp.allclose(validity, ref_f32, atol=5e-2, rtol=5e-2)

    # 2) Tiled path with >=2 grid steps and a partial last block
    #    (B=300 -> tb=152, grid=2, last block covers rows 152..303).
    B2 = 300
    img2 = jax.random.normal(k_img2, (B2,) + img_size, jnp.float32)
    validity2 = jax.block_until_ready(mnist_discriminator(img2, params))
    assert validity2.shape == (B2, 1)
    ref2 = reference_forward(img2, params, bf16_dots=True)
    assert jnp.allclose(validity2, ref2, atol=1e-3, rtol=1e-3)
    assert bool(jnp.all(jnp.isfinite(validity2)))

    print("KERNEL_OK")
</pallas_src>

<mosaic_0001>
module attributes {stable_mosaic.version = 11 : i64} {
  func.func @mnist_disc_kernel(%arg0: i32, %arg1: memref<8x784xf32, #tpu.memory_space<vmem>>, %arg2: memref<784x512xbf16, #tpu.memory_space<vmem>>, %arg3: memref<1x512xf32, #tpu.memory_space<vmem>>, %arg4: memref<512x256xbf16, #tpu.memory_space<vmem>>, %arg5: memref<1x256xf32, #tpu.memory_space<vmem>>, %arg6: memref<1x256xbf16, #tpu.memory_space<vmem>>, %arg7: memref<1x1xf32, #tpu.memory_space<smem>>, %arg8: memref<8x1xf32, #tpu.memory_space<vmem>>) attributes {dimension_semantics = [#tpu.dimension_semantics<parallel>], iteration_bounds = array<i64: 1>, scalar_prefetch = 0 : i64, scratch_operands = 0 : i64, tpu.core_type = #tpu.core_type<tc>, window_params = [{transform_indices = @transform_0, window_bounds = array<i64: 8, 784>}, {pipeline_mode = #tpu.pipeline_mode<synchronous>, transform_indices = @transform_1, window_bounds = array<i64: 784, 512>}, {pipeline_mode = #tpu.pipeline_mode<synchronous>, transform_indices = @transform_2, window_bounds = array<i64: 1, 512>}, {pipeline_mode = #tpu.pipeline_mode<synchronous>, transform_indices = @transform_3, window_bounds = array<i64: 512, 256>}, {pipeline_mode = #tpu.pipeline_mode<synchronous>, transform_indices = @transform_4, window_bounds = array<i64: 1, 256>}, {pipeline_mode = #tpu.pipeline_mode<synchronous>, transform_indices = @transform_5, window_bounds = array<i64: 1, 256>}, {transform_indices = @transform_6, window_bounds = array<i64: 1, 1>}, {transform_indices = @transform_7, window_bounds = array<i64: 8, 1>}]} {
    %c0 = arith.constant 0 : index
    %c0_0 = arith.constant 0 : index
    %0 = vector.load %arg1[%c0, %c0_0] : memref<8x784xf32, #tpu.memory_space<vmem>>, vector<8x784xf32>
    %1 = arith.truncf %0 : vector<8x784xf32> to vector<8x784xbf16>
    %c0_1 = arith.constant 0 : index
    %c0_2 = arith.constant 0 : index
    %2 = vector.load %arg2[%c0_1, %c0_2] : memref<784x512xbf16, #tpu.memory_space<vmem>>, vector<784x512xbf16>
    %cst = arith.constant dense<0.000000e+00> : vector<8x512xf32>
    %3 = tpu.matmul %1, %2, %cst {dimension_numbers = #tpu.dot_dimension_numbers<[1], [0], [0], [1], [0, 0, 1, 1], [], []>} : vector<8x784xbf16>, vector<784x512xbf16>, vector<8x512xf32> -> vector<8x512xf32>
    %c0_3 = arith.constant 0 : index
    %c0_4 = arith.constant 0 : index
    %4 = vector.load %arg3[%c0_3, %c0_4] : memref<1x512xf32, #tpu.memory_space<vmem>>, vector<1x512xf32>
    %5 = vector.broadcast %4 : vector<1x512xf32> to vector<8x512xf32>
    %6 = arith.addf %3, %5 : vector<8x512xf32>
    %cst_5 = arith.constant 0.000000e+00 : f32
    %7 = vector.broadcast %cst_5 : f32 to vector<8x512xf32>
    %8 = arith.cmpf ogt, %6, %7 : vector<8x512xf32>
    %cst_6 = arith.constant 2.000000e-01 : f32
    %9 = vector.broadcast %cst_6 : f32 to vector<8x512xf32>
    %10 = arith.mulf %9, %6 : vector<8x512xf32>
    %11 = arith.select %8, %6, %10 : vector<8x512xi1>, vector<8x512xf32>
    %12 = arith.truncf %11 : vector<8x512xf32> to vector<8x512xbf16>
    %c0_7 = arith.constant 0 : index
    %c0_8 = arith.constant 0 : index
    %13 = vector.load %arg4[%c0_7, %c0_8] : memref<512x256xbf16, #tpu.memory_space<vmem>>, vector<512x256xbf16>
    %cst_9 = arith.constant dense<0.000000e+00> : vector<8x256xf32>
    %14 = tpu.matmul %12, %13, %cst_9 {dimension_numbers = #tpu.dot_dimension_numbers<[1], [0], [0], [1], [0, 0, 1, 1], [], []>} : vector<8x512xbf16>, vector<512x256xbf16>, vector<8x256xf32> -> vector<8x256xf32>
    %c0_10 = arith.constant 0 : index
    %c0_11 = arith.constant 0 : index
    %15 = vector.load %arg5[%c0_10, %c0_11] : memref<1x256xf32, #tpu.memory_space<vmem>>, vector<1x256xf32>
    %16 = vector.broadcast %15 : vector<1x256xf32> to vector<8x256xf32>
    %17 = arith.addf %14, %16 : vector<8x256xf32>
    %cst_12 = arith.constant 0.000000e+00 : f32
    %18 = vector.broadcast %cst_12 : f32 to vector<8x256xf32>
    %19 = arith.cmpf ogt, %17, %18 : vector<8x256xf32>
    %cst_13 = arith.constant 2.000000e-01 : f32
    %20 = vector.broadcast %cst_13 : f32 to vector<8x256xf32>
    %21 = arith.mulf %20, %17 : vector<8x256xf32>
    %22 = arith.select %19, %17, %21 : vector<8x256xi1>, vector<8x256xf32>
    %c0_14 = arith.constant 0 : index
    %c0_15 = arith.constant 0 : index
    %23 = vector.load %arg6[%c0_14, %c0_15] : memref<1x256xbf16, #tpu.memory_space<vmem>>, vector<1x256xbf16>
    %24 = arith.extf %23 : vector<1x256xbf16> to vector<1x256xf32>
    %25 = vector.broadcast %24 : vector<1x256xf32> to vector<8x256xf32>
    %26 = arith.mulf %22, %25 : vector<8x256xf32>
    %cst_16 = arith.constant dense<0.000000e+00> : vector<8xf32>
    %27 = vector.multi_reduction <add>, %26, %cst_16 [1] : vector<8x256xf32> to vector<8xf32>
    %28 = vector.shape_cast %27 : vector<8xf32> to vector<8x1xf32>
    %c0_17 = arith.constant 0 : index
    %c0_18 = arith.constant 0 : index
    %29 = memref.load %arg7[%c0_17, %c0_18] : memref<1x1xf32, #tpu.memory_space<smem>>
    %30 = vector.broadcast %29 : f32 to vector<8x1xf32>
    %31 = arith.addf %28, %30 : vector<8x1xf32>
    %32 = arith.negf %31 : vector<8x1xf32>
    %33 = math.exp %32 : vector<8x1xf32>
    %cst_19 = arith.constant 1.000000e+00 : f32
    %34 = vector.broadcast %cst_19 : f32 to vector<8x1xf32>
    %35 = arith.addf %34, %33 : vector<8x1xf32>
    %36 = arith.divf %34, %35 : vector<8x1xf32>
    %c0_20 = arith.constant 0 : index
    %c0_21 = arith.constant 0 : index
    %37 = vector.load %arg8[%c0_20, %c0_21] : memref<8x1xf32, #tpu.memory_space<vmem>>, vector<8x1xf32>
    tpu.vector_store %arg8[%c0_20, %c0_21], %36 {strides = array<i32>} : memref<8x1xf32, #tpu.memory_space<vmem>>, vector<8x1xf32>,
    return
  }
  func.func @transform_0(%arg0: i32) -> (i32, i32) {
    %c0_i32 = arith.constant 0 : i32
    %c0_i32_0 = arith.constant 0 : i32
    return %arg0, %c0_i32 : i32, i32
  }
  func.func @transform_1(%arg0: i32) -> (i32, i32) {
    %c0_i32 = arith.constant 0 : i32
    %c0_i32_0 = arith.constant 0 : i32
    %c0_i32_1 = arith.constant 0 : i32
    return %c0_i32, %c0_i32_0 : i32, i32
  }
  func.func @transform_2(%arg0: i32) -> (i32, i32) {
    %c0_i32 = arith.constant 0 : i32
    %c0_i32_0 = arith.constant 0 : i32
    %c0_i32_1 = arith.constant 0 : i32
    return %c0_i32, %c0_i32_0 : i32, i32
  }
  func.func @transform_3(%arg0: i32) -> (i32, i32) {
    %c0_i32 = arith.constant 0 : i32
    %c0_i32_0 = arith.constant 0 : i32
    %c0_i32_1 = arith.constant 0 : i32
    return %c0_i32, %c0_i32_0 : i32, i32
  }
  func.func @transform_4(%arg0: i32) -> (i32, i32) {
    %c0_i32 = arith.constant 0 : i32
    %c0_i32_0 = arith.constant 0 : i32
    %c0_i32_1 = arith.constant 0 : i32
    return %c0_i32, %c0_i32_0 : i32, i32
  }
  func.func @transform_5(%arg0: i32) -> (i32, i32) {
    %c0_i32 = arith.constant 0 : i32
    %c0_i32_0 = arith.constant 0 : i32
    %c0_i32_1 = arith.constant 0 : i32
    return %c0_i32, %c0_i32_0 : i32, i32
  }
  func.func @transform_6(%arg0: i32) -> (i32, i32) {
    %c0_i32 = arith.constant 0 : i32
    %c0_i32_0 = arith.constant 0 : i32
    %c0_i32_1 = arith.constant 0 : i32
    return %c0_i32, %c0_i32_0 : i32, i32
  }
  func.func @transform_7(%arg0: i32) -> (i32, i32) {
    %c0_i32 = arith.constant 0 : i32
    %c0_i32_0 = arith.constant 0 : i32
    return %arg0, %c0_i32 : i32, i32
  }
}

</mosaic_0001>

<llo_original>
// kernel: tpu_custom_call.1
$region0: #{tpu_custom_call.1}
  #allocation0 [shape = 'u32[]', space=smem, size = 0x4, offset = 0x4, fixed_abs, tag = 'smem constant byte address 0x4 - core index']
  #allocation1 [shape = 'u32[144,128]{1,0:T(1,128)}', space=vmem, size = 0x12000, scoped, tag = 'internal scratch']
  #allocation2 [shape = 'f32[1,1]{1,0:T(1,128)S(6)}', space=smem, size = 0x200, scoped, tag = 'scoped memory for tpu_custom_call.1']
  %s0 = inlined_call_operand.hbm [shape: f32[8,784], index: 0, kind: input, shape index: {}]
  %s1 = inlined_call_operand.hbm [shape: bf16[784,512], index: 1, kind: input, shape index: {}]
  %s2 = inlined_call_operand.vmem [shape: f32[1,512], index: 2, kind: input, shape index: {}]
  %s3 = inlined_call_operand.hbm [shape: bf16[512,256], index: 3, kind: input, shape index: {}]
  %s4 = inlined_call_operand.vmem [shape: f32[1,256], index: 4, kind: input, shape index: {}]
  %s5 = inlined_call_operand.vmem [shape: bf16[1,256], index: 5, kind: input, shape index: {}]
  %s6 = inlined_call_operand.<no memory space> [shape: f32[1,1], index: 6, kind: input, shape index: {}]
  %s7 = inlined_call_operand.vmem [shape: f32[8,1], index: 7, kind: output, shape index: {}]
  %s8 = sld [smem:[#allocation0]]
  $region50: #{tpu_custom_call.1} parent=0
    _
  %s10 = ssub.s32 1, %s8
  %s11 = scalar_select 0, %s10, %s8
  %12 = sst [smem:[#allocation2]] %s6
  $region1: #{tpu_custom_call.1} parent=0
    #allocation3 [shape = 'u8[28672]{0}', space=vmem, size = 0x7000, scoped, tag = 'input window, operand 0, single buffered']
    #allocation4 [shape = 's32[1]{0}', space=sflag, size = 0x4, scoped, tag = 'scoped memory for tpu_custom_call.1']
    #allocation5 [shape = 'u8[802816]{0}', space=vmem, size = 0xc4000, scoped, tag = 'input window, operand 1, single buffered']
    #allocation6 [shape = 's32[1]{0}', space=sflag, size = 0x4, scoped, tag = 'scoped memory for tpu_custom_call.1']
    #allocation7 [shape = 'u8[262144]{0}', space=vmem, size = 0x40000, scoped, tag = 'input window, operand 3, single buffered']
    %13 = vsyncpa [#allocation4], 0
    %14 = vsyncpa [#allocation6], 0
    // Predicated region
    $region2: #{tpu_custom_call.1} parent=1 // pred_check
      _
    $region3: #{tpu_custom_call.1} parent=1 // pred_check_branch
      %16 = sbr.rel (0) target = $region5
    $region4: #{tpu_custom_call.1} parent=1 // pred_region
      %s18 = ssub.s32 896, 896
      %19 = vsyncadd [#allocation4], %s18
      %s21 = sshll.u32 [#allocation3], 4
      %s22 = int_to_ptr.vmem [resolvable:$true] %s21
      %24 = dma.hbm_to_vmem [thread:$0]  %s0, 896, %s22, [#allocation4]
    $region5: #{tpu_custom_call.1} parent=1 // pred_fallthru
      _
    // Predicated region
    $region6: #{tpu_custom_call.1} parent=1 // pred_check
      _
    $region7: #{tpu_custom_call.1} parent=1 // pred_check_branch
      %26 = sbr.rel (0) target = $region9
    $region8: #{tpu_custom_call.1} parent=1 // pred_region
      %s28 = ssub.s32 25088, 25088
      %29 = vsyncadd [#allocation6], %s28
      %s30 = sshll.u32 [#allocation5], 4
      %s31 = int_to_ptr.vmem [resolvable:$true] %s30
      %36 = dma.hbm_to_vmem [thread:$0]  %s1, 25088, %s31, [#allocation6], 256, 256, 16
    $region9: #{tpu_custom_call.1} parent=1 // pred_fallthru
      _
    // Predicated region
    $region10: #{tpu_custom_call.1} parent=1 // pred_check
      _
    $region11: #{tpu_custom_call.1} parent=1 // pred_check_branch
      %38 = sbr.rel (0) target = $region13
    $region12: #{tpu_custom_call.1} parent=1 // pred_region
      _
    $region13: #{tpu_custom_call.1} parent=1 // pred_fallthru
      _
    // Predicated region
    $region14: #{tpu_custom_call.1} parent=1 // pred_check
      _
    $region15: #{tpu_custom_call.1} parent=1 // pred_check_branch
      %40 = sbr.rel (0) target = $region17
    $region16: #{tpu_custom_call.1} parent=1 // pred_region
      %s42 = ssub.s32 8192, 8192
      %43 = vsyncadd [#allocation6], %s42
      %s44 = sshll.u32 [#allocation7], 4
      %s45 = int_to_ptr.vmem [resolvable:$true] %s44
      %50 = dma.hbm_to_vmem [thread:$0]  %s3, 8192, %s45, [#allocation6], 128, 128, 8
    $region17: #{tpu_custom_call.1} parent=1 // pred_fallthru
      _
    // Predicated region
    $region18: #{tpu_custom_call.1} parent=1 // pred_check
      _
    $region19: #{tpu_custom_call.1} parent=1 // pred_check_branch
      %52 = sbr.rel (0) target = $region21
    $region20: #{tpu_custom_call.1} parent=1 // pred_region
      _
    $region21: #{tpu_custom_call.1} parent=1 // pred_fallthru
      _
    // Predicated region
    $region22: #{tpu_custom_call.1} parent=1 // pred_check
      _
    $region23: #{tpu_custom_call.1} parent=1 // pred_check_branch
      %54 = sbr.rel (0) target = $region25
    $region24: #{tpu_custom_call.1} parent=1 // pred_region
      _
    $region25: #{tpu_custom_call.1} parent=1 // pred_fallthru
      _
    // Predicated region
    $region26: #{tpu_custom_call.1} parent=1 // pred_check
      _
    $region27: #{tpu_custom_call.1} parent=1 // pred_check_branch
      %56 = sbr.rel (0) target = $region29
    $region28: #{tpu_custom_call.1} parent=1 // pred_region
      _
    $region29: #{tpu_custom_call.1} parent=1 // pred_fallthru
      _
    // Predicated region
    $region30: #{tpu_custom_call.1} parent=1 // pred_check
      _
    $region31: #{tpu_custom_call.1} parent=1 // pred_check_branch
      %58 = sbr.rel (0) target = $region33
    $region32: #{tpu_custom_call.1} parent=1 // pred_region
      %59 = dma.done [#allocation4], 896
    $region33: #{tpu_custom_call.1} parent=1 // pred_fallthru
      _
    // Predicated region
    $region34: #{tpu_custom_call.1} parent=1 // pred_check
      _
    $region35: #{tpu_custom_call.1} parent=1 // pred_check_branch
      %61 = sbr.rel (0) target = $region37
    $region36: #{tpu_custom_call.1} parent=1 // pred_region
      %62 = dma.done [#allocation6], 25088
    $region37: #{tpu_custom_call.1} parent=1 // pred_fallthru
      _
    // Predicated region
    $region38: #{tpu_custom_call.1} parent=1 // pred_check
      _
    $region39: #{tpu_custom_call.1} parent=1 // pred_check_branch
      %64 = sbr.rel (0) target = $region41
    $region40: #{tpu_custom_call.1} parent=1 // pred_region
      %65 = dma.done [#allocation6], 8192
    $region41: #{tpu_custom_call.1} parent=1 // pred_fallthru
      _
    %v67 = vld [vmem:[#allocation3] sm:$0xff]
    %v68 = vld [vmem:[#allocation3 + $0x8] sm:$0xff]
    %v69 = vld [vmem:[#allocation3 + $0x10] sm:$0xff]
    %v70 = vld [vmem:[#allocation3 + $0x18] sm:$0xff]
    %v71 = vld [vmem:[#allocation3 + $0x20] sm:$0xff]
    %v72 = vld [vmem:[#allocation3 + $0x28] sm:$0xff]
    %v73 = vld [vmem:[#allocation3 + $0x30] sm:$0xff]
    %v74 = vpack.c.bf16 %v67, %v67
    %v75 = vpack.c.bf16 %v68, %v68
    %v76 = vpack.c.bf16 %v69, %v69
    %v77 = vpack.c.bf16 %v70, %v70
    %v78 = vpack.c.bf16 %v71, %v71
    %v79 = vpack.c.bf16 %v72, %v72
    %v80 = vpack.c.bf16 %v73, %v73
    %v81 = vld [vmem:[#allocation5] sm:$0xff]
    %v82 = vld [vmem:[#allocation5 + $0x8] sm:$0xff]
    %v83 = vld [vmem:[#allocation5 + $0x10] sm:$0xff]
    %v84 = vld [vmem:[#allocation5 + $0x18] sm:$0xff]
    %v85 = vld [vmem:[#allocation5 + $0x20] sm:$0xff]
    %v86 = vld [vmem:[#allocation5 + $0x28] sm:$0xff]
    %v87 = vld [vmem:[#allocation5 + $0x30] sm:$0xff]
    %v88 = vld [vmem:[#allocation5 + $0x38] sm:$0xff]
    %v89 = vld [vmem:[#allocation5 + $0x40] sm:$0xff]
    %v90 = vld [vmem:[#allocation5 + $0x48] sm:$0xff]
    %v91 = vld [vmem:[#allocation5 + $0x50] sm:$0xff]
    %v92 = vld [vmem:[#allocation5 + $0x58] sm:$0xff]
    %v93 = vld [vmem:[#allocation5 + $0x60] sm:$0xff]
    %v94 = vld [vmem:[#allocation5 + $0x68] sm:$0xff]
    %v95 = vld [vmem:[#allocation5 + $0x70] sm:$0xff]
    %v96 = vld [vmem:[#allocation5 + $0x78] sm:$0xff]
    %v97 = vld [vmem:[#allocation5 + $0x80] sm:$0xff]
    %v98 = vld [vmem:[#allocation5 + $0x88] sm:$0xff]
    %v99 = vld [vmem:[#allocation5 + $0x90] sm:$0xff]
    %v100 = vld [vmem:[#allocation5 + $0x98] sm:$0xff]
    %v101 = vld [vmem:[#allocation5 + $0xa0] sm:$0xff]
    %v102 = vld [vmem:[#allocation5 + $0xa8] sm:$0xff]
    %v103 = vld [vmem:[#allocation5 + $0xb0] sm:$0xff]
    %v104 = vld [vmem:[#allocation5 + $0xb8] sm:$0xff]
    %v105 = vld [vmem:[#allocation5 + $0xc0] sm:$0xff]
    %v106 = vld [vmem:[#allocation5 + $0xc8] sm:$0xff]
    %v107 = vld [vmem:[#allocation5 + $0xd0] sm:$0xff]
    %v108 = vld [vmem:[#allocation5 + $0xd8] sm:$0xff]
    %v109 = vld [vmem:[#allocation5 + $0xe0] sm:$0xff]
    %v110 = vld [vmem:[#allocation5 + $0xe8] sm:$0xff]
    %v111 = vld [vmem:[#allocation5 + $0xf0] sm:$0xff]
    %v112 = vld [vmem:[#allocation5 + $0xf8] sm:$0xff]
    %v113 = vld [vmem:[#allocation5 + $0x100] sm:$0xff]
    %v114 = vld [vmem:[#allocation5 + $0x108] sm:$0xff]
    %v115 = vld [vmem:[#allocation5 + $0x110] sm:$0xff]
    %v116 = vld [vmem:[#allocation5 + $0x118] sm:$0xff]
    %v117 = vld [vmem:[#allocation5 + $0x120] sm:$0xff]
    %v118 = vld [vmem:[#allocation5 + $0x128] sm:$0xff]
    %v119 = vld [vmem:[#allocation5 + $0x130] sm:$0xff]
    %v120 = vld [vmem:[#allocation5 + $0x138] sm:$0xff]
    %v121 = vld [vmem:[#allocation5 + $0x140] sm:$0xff]
    %v122 = vld [vmem:[#allocation5 + $0x148] sm:$0xff]
    %v123 = vld [vmem:[#allocation5 + $0x150] sm:$0xff]
    %v124 = vld [vmem:[#allocation5 + $0x158] sm:$0xff]
    %v125 = vld [vmem:[#allocation5 + $0x160] sm:$0xff]
    %v126 = vld [vmem:[#allocation5 + $0x168] sm:$0xff]
    %v127 = vld [vmem:[#allocation5 + $0x170] sm:$0xff]
    %v128 = vld [vmem:[#allocation5 + $0x178] sm:$0xff]
    %v129 = vld [vmem:[#allocation5 + $0x180] sm:$0xff]
    %v130 = vld [vmem:[#allocation5 + $0x188] sm:$0xff]
    %v131 = vld [vmem:[#allocation5 + $0x190] sm:$0xff]
    %v132 = vld [vmem:[#allocation5 + $0x198] sm:$0xff]
    %v133 = vld [vmem:[#allocation5 + $0x1a0] sm:$0xff]
    %v134 = vld [vmem:[#allocation5 + $0x1a8] sm:$0xff]
    %v135 = vld [vmem:[#allocation5 + $0x1b0] sm:$0xff]
    %v136 = vld [vmem:[#allocation5 + $0x1b8] sm:$0xff]
    %v137 = vld [vmem:[#allocation5 + $0x1c0] sm:$0xff]
    %v138 = vld [vmem:[#allocation5 + $0x1c8] sm:$0xff]
    %v139 = vld [vmem:[#allocation5 + $0x1d0] sm:$0xff]
    %v140 = vld [vmem:[#allocation5 + $0x1d8] sm:$0xff]
    %v141 = vld [vmem:[#allocation5 + $0x1e0] sm:$0xff]
    %v142 = vld [vmem:[#allocation5 + $0x1e8] sm:$0xff]
    %v143 = vld [vmem:[#allocation5 + $0x1f0] sm:$0xff]
    %v144 = vld [vmem:[#allocation5 + $0x1f8] sm:$0xff]
    %v145 = vld [vmem:[#allocation5 + $0x200] sm:$0xff]
    %v146 = vld [vmem:[#allocation5 + $0x208] sm:$0xff]
    %v147 = vld [vmem:[#allocation5 + $0x210] sm:$0xff]
    %v148 = vld [vmem:[#allocation5 + $0x218] sm:$0xff]
    %v149 = vld [vmem:[#allocation5 + $0x220] sm:$0xff]
    %v150 = vld [vmem:[#allocation5 + $0x228] sm:$0xff]
    %v151 = vld [vmem:[#allocation5 + $0x230] sm:$0xff]
    %v152 = vld [vmem:[#allocation5 + $0x238] sm:$0xff]
    %v153 = vld [vmem:[#allocation5 + $0x240] sm:$0xff]
    %v154 = vld [vmem:[#allocation5 + $0x248] sm:$0xff]
    %v155 = vld [vmem:[#allocation5 + $0x250] sm:$0xff]
    %v156 = vld [vmem:[#allocation5 + $0x258] sm:$0xff]
    %v157 = vld [vmem:[#allocation5 + $0x260] sm:$0xff]
    %v158 = vld [vmem:[#allocation5 + $0x268] sm:$0xff]
    %v159 = vld [vmem:[#allocation5 + $0x270] sm:$0xff]
    %v160 = vld [vmem:[#allocation5 + $0x278] sm:$0xff]
    %v161 = vld [vmem:[#allocation5 + $0x280] sm:$0xff]
    %v162 = vld [vmem:[#allocation5 + $0x288] sm:$0xff]
    %v163 = vld [vmem:[#allocation5 + $0x290] sm:$0xff]
    %v164 = vld [vmem:[#allocation5 + $0x298] sm:$0xff]
    %v165 = vld [vmem:[#allocation5 + $0x2a0] sm:$0xff]
    %v166 = vld [vmem:[#allocation5 + $0x2a8] sm:$0xff]
    %v167 = vld [vmem:[#allocation5 + $0x2b0] sm:$0xff]
    %v168 = vld [vmem:[#allocation5 + $0x2b8] sm:$0xff]
    %v169 = vld [vmem:[#allocation5 + $0x2c0] sm:$0xff]
    %v170 = vld [vmem:[#allocation5 + $0x2c8] sm:$0xff]
    %v171 = vld [vmem:[#allocation5 + $0x2d0] sm:$0xff]
    %v172 = vld [vmem:[#allocation5 + $0x2d8] sm:$0xff]
    %v173 = vld [vmem:[#allocation5 + $0x2e0] sm:$0xff]
    %v174 = vld [vmem:[#allocation5 + $0x2e8] sm:$0xff]
    %v175 = vld [vmem:[#allocation5 + $0x2f0] sm:$0xff]
    %v176 = vld [vmem:[#allocation5 + $0x2f8] sm:$0xff]
    %v177 = vld [vmem:[#allocation5 + $0x300] sm:$0xff]
    %v178 = vld [vmem:[#allocation5 + $0x308] sm:$0xff]
    %v179 = vld [vmem:[#allocation5 + $0x310] sm:$0xff]
    %v180 = vld [vmem:[#allocation5 + $0x318] sm:$0xff]
    %v181 = vld [vmem:[#allocation5 + $0x320] sm:$0xff]
    %v182 = vld [vmem:[#allocation5 + $0x328] sm:$0xff]
    %v183 = vld [vmem:[#allocation5 + $0x330] sm:$0xff]
    %v184 = vld [vmem:[#allocation5 + $0x338] sm:$0xff]
    %v185 = vld [vmem:[#allocation5 + $0x340] sm:$0xff]
    %v186 = vld [vmem:[#allocation5 + $0x348] sm:$0xff]
    %v187 = vld [vmem:[#allocation5 + $0x350] sm:$0xff]
    %v188 = vld [vmem:[#allocation5 + $0x358] sm:$0xff]
    %v189 = vld [vmem:[#allocation5 + $0x360] sm:$0xff]
    %v190 = vld [vmem:[#allocation5 + $0x368] sm:$0xff]
    %v191 = vld [vmem:[#allocation5 + $0x370] sm:$0xff]
    %v192 = vld [vmem:[#allocation5 + $0x378] sm:$0xff]
    %v193 = vld [vmem:[#allocation5 + $0x380] sm:$0xff]
    %v194 = vld [vmem:[#allocation5 + $0x388] sm:$0xff]
    %v195 = vld [vmem:[#allocation5 + $0x390] sm:$0xff]
    %v196 = vld [vmem:[#allocation5 + $0x398] sm:$0xff]
    %v197 = vld [vmem:[#allocation5 + $0x3a0] sm:$0xff]
    %v198 = vld [vmem:[#allocation5 + $0x3a8] sm:$0xff]
    %v199 = vld [vmem:[#allocation5 + $0x3b0] sm:$0xff]
    %v200 = vld [vmem:[#allocation5 + $0x3b8] sm:$0xff]
    %v201 = vld [vmem:[#allocation5 + $0x3c0] sm:$0xff]
    %v202 = vld [vmem:[#allocation5 + $0x3c8] sm:$0xff]
    %v203 = vld [vmem:[#allocation5 + $0x3d0] sm:$0xff]
    %v204 = vld [vmem:[#allocation5 + $0x3d8] sm:$0xff]
    %v205 = vld [vmem:[#allocation5 + $0x3e0] sm:$0xff]
    %v206 = vld [vmem:[#allocation5 + $0x3e8] sm:$0xff]
    %v207 = vld [vmem:[#allocation5 + $0x3f0] sm:$0xff]
    %v208 = vld [vmem:[#allocation5 + $0x3f8] sm:$0xff]
    %v209 = vld [vmem:[#allocation5 + $0x400] sm:$0xff]
    %v210 = vld [vmem:[#allocation5 + $0x408] sm:$0xff]
    %v211 = vld [vmem:[#allocation5 + $0x410] sm:$0xff]
    %v212 = vld [vmem:[#allocation5 + $0x418] sm:$0xff]
    %v213 = vld [vmem:[#allocation5 + $0x420] sm:$0xff]
    %v214 = vld [vmem:[#allocation5 + $0x428] sm:$0xff]
    %v215 = vld [vmem:[#allocation5 + $0x430] sm:$0xff]
    %v216 = vld [vmem:[#allocation5 + $0x438] sm:$0xff]
    %v217 = vld [vmem:[#allocation5 + $0x440] sm:$0xff]
    %v218 = vld [vmem:[#allocation5 + $0x448] sm:$0xff]
    %v219 = vld [vmem:[#allocation5 + $0x450] sm:$0xff]
    %v220 = vld [vmem:[#allocation5 + $0x458] sm:$0xff]
    %v221 = vld [vmem:[#allocation5 + $0x460] sm:$0xff]
    %v222 = vld [vmem:[#allocation5 + $0x468] sm:$0xff]
    %v223 = vld [vmem:[#allocation5 + $0x470] sm:$0xff]
    %v224 = vld [vmem:[#allocation5 + $0x478] sm:$0xff]
    %v225 = vld [vmem:[#allocation5 + $0x480] sm:$0xff]
    %v226 = vld [vmem:[#allocation5 + $0x488] sm:$0xff]
    %v227 = vld [vmem:[#allocation5 + $0x490] sm:$0xff]
    %v228 = vld [vmem:[#allocation5 + $0x498] sm:$0xff]
    %v229 = vld [vmem:[#allocation5 + $0x4a0] sm:$0xff]
    %v230 = vld [vmem:[#allocation5 + $0x4a8] sm:$0xff]
    %v231 = vld [vmem:[#allocation5 + $0x4b0] sm:$0xff]
    %v232 = vld [vmem:[#allocation5 + $0x4b8] sm:$0xff]
    %v233 = vld [vmem:[#allocation5 + $0x4c0] sm:$0xff]
    %v234 = vld [vmem:[#allocation5 + $0x4c8] sm:$0xff]
    %v235 = vld [vmem:[#allocation5 + $0x4d0] sm:$0xff]
    %v236 = vld [vmem:[#allocation5 + $0x4d8] sm:$0xff]
    %v237 = vld [vmem:[#allocation5 + $0x4e0] sm:$0xff]
    %v238 = vld [vmem:[#allocation5 + $0x4e8] sm:$0xff]
    %v239 = vld [vmem:[#allocation5 + $0x4f0] sm:$0xff]
    %v240 = vld [vmem:[#allocation5 + $0x4f8] sm:$0xff]
    %v241 = vld [vmem:[#allocation5 + $0x500] sm:$0xff]
    %v242 = vld [vmem:[#allocation5 + $0x508] sm:$0xff]
    %v243 = vld [vmem:[#allocation5 + $0x510] sm:$0xff]
    %v244 = vld [vmem:[#allocation5 + $0x518] sm:$0xff]
    %v245 = vld [vmem:[#allocation5 + $0x520] sm:$0xff]
    %v246 = vld [vmem:[#allocation5 + $0x528] sm:$0xff]
    %v247 = vld [vmem:[#allocation5 + $0x530] sm:$0xff]
    %v248 = vld [vmem:[#allocation5 + $0x538] sm:$0xff]
    %v249 = vld [vmem:[#allocation5 + $0x540] sm:$0xff]
    %v250 = vld [vmem:[#allocation5 + $0x548] sm:$0xff]
    %v251 = vld [vmem:[#allocation5 + $0x550] sm:$0xff]
    %v252 = vld [vmem:[#allocation5 + $0x558] sm:$0xff]
    %v253 = vld [vmem:[#allocation5 + $0x560] sm:$0xff]
    %v254 = vld [vmem:[#allocation5 + $0x568] sm:$0xff]
    %v255 = vld [vmem:[#allocation5 + $0x570] sm:$0xff]
    %v256 = vld [vmem:[#allocation5 + $0x578] sm:$0xff]
    %v257 = vld [vmem:[#allocation5 + $0x580] sm:$0xff]
    %v258 = vld [vmem:[#allocation5 + $0x588] sm:$0xff]
    %v259 = vld [vmem:[#allocation5 + $0x590] sm:$0xff]
    %v260 = vld [vmem:[#allocation5 + $0x598] sm:$0xff]
    %v261 = vld [vmem:[#allocation5 + $0x5a0] sm:$0xff]
    %v262 = vld [vmem:[#allocation5 + $0x5a8] sm:$0xff]
    %v263 = vld [vmem:[#allocation5 + $0x5b0] sm:$0xff]
    %v264 = vld [vmem:[#allocation5 + $0x5b8] sm:$0xff]
    %v265 = vld [vmem:[#allocation5 + $0x5c0] sm:$0xff]
    %v266 = vld [vmem:[#allocation5 + $0x5c8] sm:$0xff]
    %v267 = vld [vmem:[#allocation5 + $0x5d0] sm:$0xff]
    %v268 = vld [vmem:[#allocation5 + $0x5d8] sm:$0xff]
    %v269 = vld [vmem:[#allocation5 + $0x5e0] sm:$0xff]
    %v270 = vld [vmem:[#allocation5 + $0x5e8] sm:$0xff]
    %v271 = vld [vmem:[#allocation5 + $0x5f0] sm:$0xff]
    %v272 = vld [vmem:[#allocation5 + $0x5f8] sm:$0xff]
    %v273 = vld [vmem:[#allocation5 + $0x600] sm:$0xff]
    %v274 = vld [vmem:[#allocation5 + $0x608] sm:$0xff]
    %v275 = vld [vmem:[#allocation5 + $0x610] sm:$0xff]
    %v276 = vld [vmem:[#allocation5 + $0x618] sm:$0xff]
    %v277 = vld [vmem:[%s2] sm:$0xf]
    %v279 = vlaneseq
    %v280 = vshrl.u32 %v279, 7
    %v281 = vsub.s32 0, %v280
    %v282 = vrot.slane %v277, %v281
    %v283 = vlaneseq
    %v284 = vshrl.u32 %v283, 7
    %v285 = vsub.s32 1, %v284
    %v286 = vrot.slane %v277, %v285
    %v287 = vlaneseq
    %v288 = vshrl.u32 %v287, 7
    %v289 = vsub.s32 2, %v288
    %v290 = vrot.slane %v277, %v289
    %v291 = vlaneseq
    %v292 = vshrl.u32 %v291, 7
    %v293 = vsub.s32 3, %v292
    %v294 = vrot.slane %v277, %v293
    %v495 = vunpack.c.l.b16 %v81
    %v496 = vunpack.c.h.b16 %v81
    %v497 = vunpack.c.l.b16 %v82
    %v498 = vunpack.c.h.b16 %v82
    %v499 = vunpack.c.l.b16 %v83
    %v500 = vunpack.c.h.b16 %v83
    %v501 = vunpack.c.l.b16 %v84
    %v502 = vunpack.c.h.b16 %v84
    %v503 = vunpack.c.l.b16 %v85
    %v504 = vunpack.c.h.b16 %v85
    %v505 = vunpack.c.l.b16 %v86
    %v506 = vunpack.c.h.b16 %v86
    %v507 = vunpack.c.l.b16 %v87
    %v508 = vunpack.c.h.b16 %v87
    %v509 = vunpack.c.l.b16 %v88
    %v510 = vunpack.c.h.b16 %v88
    %v511 = vunpack.c.l.b16 %v89
    %v512 = vunpack.c.h.b16 %v89
    %v513 = vunpack.c.l.b16 %v90
    %v514 = vunpack.c.h.b16 %v90
    %v515 = vunpack.c.l.b16 %v91
    %v516 = vunpack.c.h.b16 %v91
    %v517 = vunpack.c.l.b16 %v92
    %v518 = vunpack.c.h.b16 %v92
    %v519 = vunpack.c.l.b16 %v93
    %v520 = vunpack.c.h.b16 %v93
    %v521 = vunpack.c.l.b16 %v94
    %v522 = vunpack.c.h.b16 %v94
    %v523 = vunpack.c.l.b16 %v95
    %v524 = vunpack.c.h.b16 %v95
    %v525 = vunpack.c.l.b16 %v96
    %v526 = vunpack.c.h.b16 %v96
    %v527 = vunpack.c.l.b16 %v97
    %v528 = vunpack.c.h.b16 %v97
    %v529 = vunpack.c.l.b16 %v98
    %v530 = vunpack.c.h.b16 %v98
    %v531 = vunpack.c.l.b16 %v99
    %v532 = vunpack.c.h.b16 %v99
    %v533 = vunpack.c.l.b16 %v100
    %v534 = vunpack.c.h.b16 %v100
    %v535 = vunpack.c.l.b16 %v101
    %v536 = vunpack.c.h.b16 %v101
    %v537 = vunpack.c.l.b16 %v102
    %v538 = vunpack.c.h.b16 %v102
    %v539 = vunpack.c.l.b16 %v103
    %v540 = vunpack.c.h.b16 %v103
    %v541 = vunpack.c.l.b16 %v104
    %v542 = vunpack.c.h.b16 %v104
    %v543 = vunpack.c.l.b16 %v105
    %v544 = vunpack.c.h.b16 %v105
    %v545 = vunpack.c.l.b16 %v106
    %v546 = vunpack.c.h.b16 %v106
    %v547 = vunpack.c.l.b16 %v107
    %v548 = vunpack.c.h.b16 %v107
    %v549 = vunpack.c.l.b16 %v108
    %v550 = vunpack.c.h.b16 %v108
    %v551 = vunpack.c.l.b16 %v109
    %v552 = vunpack.c.h.b16 %v109
    %v553 = vunpack.c.l.b16 %v110
    %v554 = vunpack.c.h.b16 %v110
    %v555 = vunpack.c.l.b16 %v111
    %v556 = vunpack.c.h.b16 %v111
    %v557 = vunpack.c.l.b16 %v112
    %v558 = vunpack.c.h.b16 %v112
    %v559 = vunpack.c.l.b16 %v113
    %v560 = vunpack.c.h.b16 %v113
    %v561 = vunpack.c.l.b16 %v114
    %v562 = vunpack.c.h.b16 %v114
    %v563 = vunpack.c.l.b16 %v115
    %v564 = vunpack.c.h.b16 %v115
    %v565 = vunpack.c.l.b16 %v116
    %v566 = vunpack.c.h.b16 %v116
    %v567 = vunpack.c.l.b16 %v117
    %v568 = vunpack.c.h.b16 %v117
    %v569 = vunpack.c.l.b16 %v118
    %v570 = vunpack.c.h.b16 %v118
    %v571 = vunpack.c.l.b16 %v119
    %v572 = vunpack.c.h.b16 %v119
    %v573 = vunpack.c.l.b16 %v120
    %v574 = vunpack.c.h.b16 %v120
    %v575 = vunpack.c.l.b16 %v121
    %v576 = vunpack.c.h.b16 %v121
    %v577 = vunpack.c.l.b16 %v122
    %v578 = vunpack.c.h.b16 %v122
    %v579 = vunpack.c.l.b16 %v123
    %v580 = vunpack.c.h.b16 %v123
    %v581 = vunpack.c.l.b16 %v124
    %v582 = vunpack.c.h.b16 %v124
    %v583 = vunpack.c.l.b16 %v125
    %v584 = vunpack.c.h.b16 %v125
    %v585 = vunpack.c.l.b16 %v126
    %v586 = vunpack.c.h.b16 %v126
    %v587 = vunpack.c.l.b16 %v127
    %v588 = vunpack.c.h.b16 %v127
    %v589 = vunpack.c.l.b16 %v128
    %v590 = vunpack.c.h.b16 %v128
    %v591 = vunpack.c.l.b16 %v129
    %v592 = vunpack.c.h.b16 %v129
    %v593 = vunpack.c.l.b16 %v130
    %v594 = vunpack.c.h.b16 %v130
    %v595 = vunpack.c.l.b16 %v131
    %v596 = vunpack.c.h.b16 %v131
    %v597 = vunpack.c.l.b16 %v132
    %v598 = vunpack.c.h.b16 %v132
    %v599 = vunpack.c.l.b16 %v133
    %v600 = vunpack.c.h.b16 %v133
    %v601 = vunpack.c.l.b16 %v134
    %v602 = vunpack.c.h.b16 %v134
    %v603 = vunpack.c.l.b16 %v135
    %v604 = vunpack.c.h.b16 %v135
    %v605 = vunpack.c.l.b16 %v136
    %v606 = vunpack.c.h.b16 %v136
    %v607 = vunpack.c.l.b16 %v137
    %v608 = vunpack.c.h.b16 %v137
    %v609 = vunpack.c.l.b16 %v138
    %v610 = vunpack.c.h.b16 %v138
    %v611 = vunpack.c.l.b16 %v139
    %v612 = vunpack.c.h.b16 %v139
    %v613 = vunpack.c.l.b16 %v140
    %v614 = vunpack.c.h.b16 %v140
    %v615 = vunpack.c.l.b16 %v141
    %v616 = vunpack.c.h.b16 %v141
    %v617 = vunpack.c.l.b16 %v142
    %v618 = vunpack.c.h.b16 %v142
    %v619 = vunpack.c.l.b16 %v143
    %v620 = vunpack.c.h.b16 %v143
    %v621 = vunpack.c.l.b16 %v144
    %v622 = vunpack.c.h.b16 %v144
    %v623 = vunpack.c.l.b16 %v145
    %v624 = vunpack.c.h.b16 %v145
    %v625 = vunpack.c.l.b16 %v146
    %v626 = vunpack.c.h.b16 %v146
    %v627 = vunpack.c.l.b16 %v147
    %v628 = vunpack.c.h.b16 %v147
    %v629 = vunpack.c.l.b16 %v148
    %v630 = vunpack.c.h.b16 %v148
    %v631 = vunpack.c.l.b16 %v149
    %v632 = vunpack.c.h.b16 %v149
    %v633 = vunpack.c.l.b16 %v150
    %v634 = vunpack.c.h.b16 %v150
    %v635 = vunpack.c.l.b16 %v151
    %v636 = vunpack.c.h.b16 %v151
    %v637 = vunpack.c.l.b16 %v152
    %v638 = vunpack.c.h.b16 %v152
    %v639 = vunpack.c.l.b16 %v153
    %v640 = vunpack.c.h.b16 %v153
    %v641 = vunpack.c.l.b16 %v154
    %v642 = vunpack.c.h.b16 %v154
    %v643 = vunpack.c.l.b16 %v155
    %v644 = vunpack.c.h.b16 %v155
    %v645 = vunpack.c.l.b16 %v156
    %v646 = vunpack.c.h.b16 %v156
    %v647 = vunpack.c.l.b16 %v157
    %v648 = vunpack.c.h.b16 %v157
    %v649 = vunpack.c.l.b16 %v158
    %v650 = vunpack.c.h.b16 %v158
    %v651 = vunpack.c.l.b16 %v159
    %v652 = vunpack.c.h.b16 %v159
    %v653 = vunpack.c.l.b16 %v160
    %v654 = vunpack.c.h.b16 %v160
    %v655 = vunpack.c.l.b16 %v161
    %v656 = vunpack.c.h.b16 %v161
    %v657 = vunpack.c.l.b16 %v162
    %v658 = vunpack.c.h.b16 %v162
    %v659 = vunpack.c.l.b16 %v163
    %v660 = vunpack.c.h.b16 %v163
    %v661 = vunpack.c.l.b16 %v164
    %v662 = vunpack.c.h.b16 %v164
    %v663 = vunpack.c.l.b16 %v165
    %v664 = vunpack.c.h.b16 %v165
    %v665 = vunpack.c.l.b16 %v166
    %v666 = vunpack.c.h.b16 %v166
    %v667 = vunpack.c.l.b16 %v167
    %v668 = vunpack.c.h.b16 %v167
    %v669 = vunpack.c.l.b16 %v168
    %v670 = vunpack.c.h.b16 %v168
    %v671 = vunpack.c.l.b16 %v169
    %v672 = vunpack.c.h.b16 %v169
    %v673 = vunpack.c.l.b16 %v170
    %v674 = vunpack.c.h.b16 %v170
    %v675 = vunpack.c.l.b16 %v171
    %v676 = vunpack.c.h.b16 %v171
    %v677 = vunpack.c.l.b16 %v172
    %v678 = vunpack.c.h.b16 %v172
    %v679 = vunpack.c.l.b16 %v173
    %v680 = vunpack.c.h.b16 %v173
    %v681 = vunpack.c.l.b16 %v174
    %v682 = vunpack.c.h.b16 %v174
    %v683 = vunpack.c.l.b16 %v175
    %v684 = vunpack.c.h.b16 %v175
    %v685 = vunpack.c.l.b16 %v176
    %v686 = vunpack.c.h.b16 %v176
    %v687 = vunpack.c.l.b16 %v177
    %v688 = vunpack.c.h.b16 %v177
    %v689 = vunpack.c.l.b16 %v178
    %v690 = vunpack.c.h.b16 %v178
    %v691 = vunpack.c.l.b16 %v179
    %v692 = vunpack.c.h.b16 %v179
    %v693 = vunpack.c.l.b16 %v180
    %v694 = vunpack.c.h.b16 %v180
    %v695 = vunpack.c.l.b16 %v181
    %v696 = vunpack.c.h.b16 %v181
    %v697 = vunpack.c.l.b16 %v182
    %v698 = vunpack.c.h.b16 %v182
    %v699 = vunpack.c.l.b16 %v183
    %v700 = vunpack.c.h.b16 %v183
    %v701 = vunpack.c.l.b16 %v184
    %v702 = vunpack.c.h.b16 %v184
    %v703 = vunpack.c.l.b16 %v185
    %v704 = vunpack.c.h.b16 %v185
    %v705 = vunpack.c.l.b16 %v186
    %v706 = vunpack.c.h.b16 %v186
    %v707 = vunpack.c.l.b16 %v187
    %v708 = vunpack.c.h.b16 %v187
    %v709 = vunpack.c.l.b16 %v188
    %v710 = vunpack.c.h.b16 %v188
    %v711 = vunpack.c.l.b16 %v189
    %v712 = vunpack.c.h.b16 %v189
    %v713 = vunpack.c.l.b16 %v190
    %v714 = vunpack.c.h.b16 %v190
    %v715 = vunpack.c.l.b16 %v191
    %v716 = vunpack.c.h.b16 %v191
    %v717 = vunpack.c.l.b16 %v192
    %v718 = vunpack.c.h.b16 %v192
    %v719 = vunpack.c.l.b16 %v193
    %v720 = vunpack.c.h.b16 %v193
    %v721 = vunpack.c.l.b16 %v194
    %v722 = vunpack.c.h.b16 %v194
    %v723 = vunpack.c.l.b16 %v195
    %v724 = vunpack.c.h.b16 %v195
    %v725 = vunpack.c.l.b16 %v196
    %v726 = vunpack.c.h.b16 %v196
    %v727 = vunpack.c.l.b16 %v197
    %v728 = vunpack.c.h.b16 %v197
    %v729 = vunpack.c.l.b16 %v198
    %v730 = vunpack.c.h.b16 %v198
    %v731 = vunpack.c.l.b16 %v199
    %v732 = vunpack.c.h.b16 %v199
    %v733 = vunpack.c.l.b16 %v200
    %v734 = vunpack.c.h.b16 %v200
    %v735 = vunpack.c.l.b16 %v201
    %v736 = vunpack.c.h.b16 %v201
    %v737 = vunpack.c.l.b16 %v202
    %v738 = vunpack.c.h.b16 %v202
    %v739 = vunpack.c.l.b16 %v203
    %v740 = vunpack.c.h.b16 %v203
    %v741 = vunpack.c.l.b16 %v204
    %v742 = vunpack.c.h.b16 %v204
    %v743 = vunpack.c.l.b16 %v205
    %v744 = vunpack.c.h.b16 %v205
    %v745 = vunpack.c.l.b16 %v206
    %v746 = vunpack.c.h.b16 %v206
    %v747 = vunpack.c.l.b16 %v207
    %v748 = vunpack.c.h.b16 %v207
    %v749 = vunpack.c.l.b16 %v208
    %v750 = vunpack.c.h.b16 %v208
    %v751 = vunpack.c.l.b16 %v209
    %v752 = vunpack.c.h.b16 %v209
    %v753 = vunpack.c.l.b16 %v210
    %v754 = vunpack.c.h.b16 %v210
    %v755 = vunpack.c.l.b16 %v211
    %v756 = vunpack.c.h.b16 %v211
    %v757 = vunpack.c.l.b16 %v212
    %v758 = vunpack.c.h.b16 %v212
    %v759 = vunpack.c.l.b16 %v213
    %v760 = vunpack.c.h.b16 %v213
    %v761 = vunpack.c.l.b16 %v214
    %v762 = vunpack.c.h.b16 %v214
    %v763 = vunpack.c.l.b16 %v215
    %v764 = vunpack.c.h.b16 %v215
    %v765 = vunpack.c.l.b16 %v216
    %v766 = vunpack.c.h.b16 %v216
    %v767 = vunpack.c.l.b16 %v217
    %v768 = vunpack.c.h.b16 %v217
    %v769 = vunpack.c.l.b16 %v218
    %v770 = vunpack.c.h.b16 %v218
    %v771 = vunpack.c.l.b16 %v219
    %v772 = vunpack.c.h.b16 %v219
    %v773 = vunpack.c.l.b16 %v220
    %v774 = vunpack.c.h.b16 %v220
    %v775 = vunpack.c.l.b16 %v221
    %v776 = vunpack.c.h.b16 %v221
    %v777 = vunpack.c.l.b16 %v222
    %v778 = vunpack.c.h.b16 %v222
    %v779 = vunpack.c.l.b16 %v223
    %v780 = vunpack.c.h.b16 %v223
    %v781 = vunpack.c.l.b16 %v224
    %v782 = vunpack.c.h.b16 %v224
    %v783 = vunpack.c.l.b16 %v225
    %v784 = vunpack.c.h.b16 %v225
    %v785 = vunpack.c.l.b16 %v226
    %v786 = vunpack.c.h.b16 %v226
    %v787 = vunpack.c.l.b16 %v227
    %v788 = vunpack.c.h.b16 %v227
    %v789 = vunpack.c.l.b16 %v228
    %v790 = vunpack.c.h.b16 %v228
    %v791 = vunpack.c.l.b16 %v229
    %v792 = vunpack.c.h.b16 %v229
    %v793 = vunpack.c.l.b16 %v230
    %v794 = vunpack.c.h.b16 %v230
    %v795 = vunpack.c.l.b16 %v231
    %v796 = vunpack.c.h.b16 %v231
    %v797 = vunpack.c.l.b16 %v232
    %v798 = vunpack.c.h.b16 %v232
    %v799 = vunpack.c.l.b16 %v233
    %v800 = vunpack.c.h.b16 %v233
    %v801 = vunpack.c.l.b16 %v234
    %v802 = vunpack.c.h.b16 %v234
    %v803 = vunpack.c.l.b16 %v235
    %v804 = vunpack.c.h.b16 %v235
    %v805 = vunpack.c.l.b16 %v236
    %v806 = vunpack.c.h.b16 %v236
    %v807 = vunpack.c.l.b16 %v237
    %v808 = vunpack.c.h.b16 %v237
    %v809 = vunpack.c.l.b16 %v238
    %v810 = vunpack.c.h.b16 %v238
    %v811 = vunpack.c.l.b16 %v239
    %v812 = vunpack.c.h.b16 %v239
    %v813 = vunpack.c.l.b16 %v240
    %v814 = vunpack.c.h.b16 %v240
    %v815 = vunpack.c.l.b16 %v241
    %v816 = vunpack.c.h.b16 %v241
    %v817 = vunpack.c.l.b16 %v242
    %v818 = vunpack.c.h.b16 %v242
    %v819 = vunpack.c.l.b16 %v243
    %v820 = vunpack.c.h.b16 %v243
    %v821 = vunpack.c.l.b16 %v244
    %v822 = vunpack.c.h.b16 %v244
    %v823 = vunpack.c.l.b16 %v245
    %v824 = vunpack.c.h.b16 %v245
    %v825 = vunpack.c.l.b16 %v246
    %v826 = vunpack.c.h.b16 %v246
    %v827 = vunpack.c.l.b16 %v247
    %v828 = vunpack.c.h.b16 %v247
    %v829 = vunpack.c.l.b16 %v248
    %v830 = vunpack.c.h.b16 %v248
    %v831 = vunpack.c.l.b16 %v249
    %v832 = vunpack.c.h.b16 %v249
    %v833 = vunpack.c.l.b16 %v250
    %v834 = vunpack.c.h.b16 %v250
    %v835 = vunpack.c.l.b16 %v251
    %v836 = vunpack.c.h.b16 %v251
    %v837 = vunpack.c.l.b16 %v252
    %v838 = vunpack.c.h.b16 %v252
    %v839 = vunpack.c.l.b16 %v253
    %v840 = vunpack.c.h.b16 %v253
    %v841 = vunpack.c.l.b16 %v254
    %v842 = vunpack.c.h.b16 %v254
    %v843 = vunpack.c.l.b16 %v255
    %v844 = vunpack.c.h.b16 %v255
    %v845 = vunpack.c.l.b16 %v256
    %v846 = vunpack.c.h.b16 %v256
    %v847 = vunpack.c.l.b16 %v257
    %v848 = vunpack.c.h.b16 %v257
    %v849 = vunpack.c.l.b16 %v258
    %v850 = vunpack.c.h.b16 %v258
    %v851 = vunpack.c.l.b16 %v259
    %v852 = vunpack.c.h.b16 %v259
    %v853 = vunpack.c.l.b16 %v260
    %v854 = vunpack.c.h.b16 %v260
    %v855 = vunpack.c.l.b16 %v261
    %v856 = vunpack.c.h.b16 %v261
    %v857 = vunpack.c.l.b16 %v262
    %v858 = vunpack.c.h.b16 %v262
    %v859 = vunpack.c.l.b16 %v263
    %v860 = vunpack.c.h.b16 %v263
    %v861 = vunpack.c.l.b16 %v264
    %v862 = vunpack.c.h.b16 %v264
    %v863 = vunpack.c.l.b16 %v265
    %v864 = vunpack.c.h.b16 %v265
    %v865 = vunpack.c.l.b16 %v266
    %v866 = vunpack.c.h.b16 %v266
    %v867 = vunpack.c.l.b16 %v267
    %v868 = vunpack.c.h.b16 %v267
    %v869 = vunpack.c.l.b16 %v268
    %v870 = vunpack.c.h.b16 %v268
    %v871 = vunpack.c.l.b16 %v269
    %v872 = vunpack.c.h.b16 %v269
    %v873 = vunpack.c.l.b16 %v270
    %v874 = vunpack.c.h.b16 %v270
    %v875 = vunpack.c.l.b16 %v271
    %v876 = vunpack.c.h.b16 %v271
    %v877 = vunpack.c.l.b16 %v272
    %v878 = vunpack.c.h.b16 %v272
    %v879 = vunpack.c.l.b16 %v273
    %v880 = vunpack.c.h.b16 %v273
    %v881 = vunpack.c.l.b16 %v274
    %v882 = vunpack.c.h.b16 %v274
    %v883 = vunpack.c.l.b16 %v275
    %v884 = vunpack.c.h.b16 %v275
    %v885 = vunpack.c.l.b16 %v276
    %v886 = vunpack.c.h.b16 %v276
    %v887 = vpack.c.b16 %v499, %v495
    %v888 = vpack.c.b16 %v500, %v496
    %v889 = vpack.c.b16 %v501, %v497
    %v890 = vpack.c.b16 %v502, %v498
    %v891 = vpack.c.b16 %v507, %v503
    %v892 = vpack.c.b16 %v508, %v504
    %v893 = vpack.c.b16 %v509, %v505
    %v894 = vpack.c.b16 %v510, %v506
    %v895 = vpack.c.b16 %v515, %v511
    %v896 = vpack.c.b16 %v516, %v512
    %v897 = vpack.c.b16 %v517, %v513
    %v898 = vpack.c.b16 %v518, %v514
    %v899 = vpack.c.b16 %v523, %v519
    %v900 = vpack.c.b16 %v524, %v520
    %v901 = vpack.c.b16 %v525, %v521
    %v902 = vpack.c.b16 %v526, %v522
    %v903 = vpack.c.b16 %v531, %v527
    %v904 = vpack.c.b16 %v532, %v528
    %v905 = vpack.c.b16 %v533, %v529
    %v906 = vpack.c.b16 %v534, %v530
    %v907 = vpack.c.b16 %v539, %v535
    %v908 = vpack.c.b16 %v540, %v536
    %v909 = vpack.c.b16 %v541, %v537
    %v910 = vpack.c.b16 %v542, %v538
    %v911 = vpack.c.b16 %v547, %v543
    %v912 = vpack.c.b16 %v548, %v544
    %v913 = vpack.c.b16 %v549, %v545
    %v914 = vpack.c.b16 %v550, %v546
    %v915 = vpack.c.b16 %v555, %v551
    %v916 = vpack.c.b16 %v556, %v552
    %v917 = vpack.c.b16 %v557, %v553
    %v918 = vpack.c.b16 %v558, %v554
    %v919 = vpack.c.b16 %v563, %v559
    %v920 = vpack.c.b16 %v564, %v560
    %v921 = vpack.c.b16 %v565, %v561
    %v922 = vpack.c.b16 %v566, %v562
    %v923 = vpack.c.b16 %v571, %v567
    %v924 = vpack.c.b16 %v572, %v568
    %v925 = vpack.c.b16 %v573, %v569
    %v926 = vpack.c.b16 %v574, %v570
    %v927 = vpack.c.b16 %v579, %v575
    %v928 = vpack.c.b16 %v580, %v576
    %v929 = vpack.c.b16 %v581, %v577
    %v930 = vpack.c.b16 %v582, %v578
    %v931 = vpack.c.b16 %v587, %v583
    %v932 = vpack.c.b16 %v588, %v584
    %v933 = vpack.c.b16 %v589, %v585
    %v934 = vpack.c.b16 %v590, %v586
    %v935 = vpack.c.b16 %v595, %v591
    %v936 = vpack.c.b16 %v596, %v592
    %v937 = vpack.c.b16 %v597, %v593
    %v938 = vpack.c.b16 %v598, %v594
    %v939 = vpack.c.b16 %v603, %v599
    %v940 = vpack.c.b16 %v604, %v600
    %v941 = vpack.c.b16 %v605, %v601
    %v942 = vpack.c.b16 %v606, %v602
    %v943 = vpack.c.b16 %v611, %v607
    %v944 = vpack.c.b16 %v612, %v608
    %v945 = vpack.c.b16 %v613, %v609
    %v946 = vpack.c.b16 %v614, %v610
    %v947 = vpack.c.b16 %v619, %v615
    %v948 = vpack.c.b16 %v620, %v616
    %v949 = vpack.c.b16 %v621, %v617
    %v950 = vpack.c.b16 %v622, %v618
    %v951 = vpack.c.b16 %v627, %v623
    %v952 = vpack.c.b16 %v628, %v624
    %v953 = vpack.c.b16 %v629, %v625
    %v954 = vpack.c.b16 %v630, %v626
    %v955 = vpack.c.b16 %v635, %v631
    %v956 = vpack.c.b16 %v636, %v632
    %v957 = vpack.c.b16 %v637, %v633
    %v958 = vpack.c.b16 %v638, %v634
    %v959 = vpack.c.b16 %v643, %v639
    %v960 = vpack.c.b16 %v644, %v640
    %v961 = vpack.c.b16 %v645, %v641
    %v962 = vpack.c.b16 %v646, %v642
    %v963 = vpack.c.b16 %v651, %v647
    %v964 = vpack.c.b16 %v652, %v648
    %v965 = vpack.c.b16 %v653, %v649
    %v966 = vpack.c.b16 %v654, %v650
    %v967 = vpack.c.b16 %v659, %v655
    %v968 = vpack.c.b16 %v660, %v656
    %v969 = vpack.c.b16 %v661, %v657
    %v970 = vpack.c.b16 %v662, %v658
    %v971 = vpack.c.b16 %v667, %v663
    %v972 = vpack.c.b16 %v668, %v664
    %v973 = vpack.c.b16 %v669, %v665
    %v974 = vpack.c.b16 %v670, %v666
    %v975 = vpack.c.b16 %v675, %v671
    %v976 = vpack.c.b16 %v676, %v672
    %v977 = vpack.c.b16 %v677, %v673
    %v978 = vpack.c.b16 %v678, %v674
    %v979 = vpack.c.b16 %v683, %v679
    %v980 = vpack.c.b16 %v684, %v680
    %v981 = vpack.c.b16 %v685, %v681
    %v982 = vpack.c.b16 %v686, %v682
    %v983 = vpack.c.b16 %v691, %v687
    %v984 = vpack.c.b16 %v692, %v688
    %v985 = vpack.c.b16 %v693, %v689
    %v986 = vpack.c.b16 %v694, %v690
    %v987 = vpack.c.b16 %v699, %v695
    %v988 = vpack.c.b16 %v700, %v696
    %v989 = vpack.c.b16 %v701, %v697
    %v990 = vpack.c.b16 %v702, %v698
    %v991 = vpack.c.b16 %v707, %v703
    %v992 = vpack.c.b16 %v708, %v704
    %v993 = vpack.c.b16 %v709, %v705
    %v994 = vpack.c.b16 %v710, %v706
    %v995 = vpack.c.b16 %v715, %v711
    %v996 = vpack.c.b16 %v716, %v712
    %v997 = vpack.c.b16 %v717, %v713
    %v998 = vpack.c.b16 %v718, %v714
    %v999 = vpack.c.b16 %v723, %v719
    %v1000 = vpack.c.b16 %v724, %v720
    %v1001 = vpack.c.b16 %v725, %v721
    %v1002 = vpack.c.b16 %v726, %v722
    %v1003 = vpack.c.b16 %v731, %v727
    %v1004 = vpack.c.b16 %v732, %v728
    %v1005 = vpack.c.b16 %v733, %v729
    %v1006 = vpack.c.b16 %v734, %v730
    %v1007 = vpack.c.b16 %v739, %v735
    %v1008 = vpack.c.b16 %v740, %v736
    %v1009 = vpack.c.b16 %v741, %v737
    %v1010 = vpack.c.b16 %v742, %v738
    %v1011 = vpack.c.b16 %v747, %v743
    %v1012 = vpack.c.b16 %v748, %v744
    %v1013 = vpack.c.b16 %v749, %v745
    %v1014 = vpack.c.b16 %v750, %v746
    %v1015 = vpack.c.b16 %v755, %v751
    %v1016 = vpack.c.b16 %v756, %v752
    %v1017 = vpack.c.b16 %v757, %v753
    %v1018 = vpack.c.b16 %v758, %v754
    %v1019 = vpack.c.b16 %v763, %v759
    %v1020 = vpack.c.b16 %v764, %v760
    %v1021 = vpack.c.b16 %v765, %v761
    %v1022 = vpack.c.b16 %v766, %v762
    %v1023 = vpack.c.b16 %v771, %v767
    %v1024 = vpack.c.b16 %v772, %v768
    %v1025 = vpack.c.b16 %v773, %v769
    %v1026 = vpack.c.b16 %v774, %v770
    %v1027 = vpack.c.b16 %v779, %v775
    %v1028 = vpack.c.b16 %v780, %v776
    %v1029 = vpack.c.b16 %v781, %v777
    %v1030 = vpack.c.b16 %v782, %v778
    %v1031 = vpack.c.b16 %v787, %v783
    %v1032 = vpack.c.b16 %v788, %v784
    %v1033 = vpack.c.b16 %v789, %v785
    %v1034 = vpack.c.b16 %v790, %v786
    %v1035 = vpack.c.b16 %v795, %v791
    %v1036 = vpack.c.b16 %v796, %v792
    %v1037 = vpack.c.b16 %v797, %v793
    %v1038 = vpack.c.b16 %v798, %v794
    %v1039 = vpack.c.b16 %v803, %v799
    %v1040 = vpack.c.b16 %v804, %v800
    %v1041 = vpack.c.b16 %v805, %v801
    %v1042 = vpack.c.b16 %v806, %v802
    %v1043 = vpack.c.b16 %v811, %v807
    %v1044 = vpack.c.b16 %v812, %v808
    %v1045 = vpack.c.b16 %v813, %v809
    %v1046 = vpack.c.b16 %v814, %v810
    %v1047 = vpack.c.b16 %v819, %v815
    %v1048 = vpack.c.b16 %v820, %v816
    %v1049 = vpack.c.b16 %v821, %v817
    %v1050 = vpack.c.b16 %v822, %v818
    %v1051 = vpack.c.b16 %v827, %v823
    %v1052 = vpack.c.b16 %v828, %v824
    %v1053 = vpack.c.b16 %v829, %v825
    %v1054 = vpack.c.b16 %v830, %v826
    %v1055 = vpack.c.b16 %v835, %v831
    %v1056 = vpack.c.b16 %v836, %v832
    %v1057 = vpack.c.b16 %v837, %v833
    %v1058 = vpack.c.b16 %v838, %v834
    %v1059 = vpack.c.b16 %v843, %v839
    %v1060 = vpack.c.b16 %v844, %v840
    %v1061 = vpack.c.b16 %v845, %v841
    %v1062 = vpack.c.b16 %v846, %v842
    %v1063 = vpack.c.b16 %v851, %v847
    %v1064 = vpack.c.b16 %v852, %v848
    %v1065 = vpack.c.b16 %v853, %v849
    %v1066 = vpack.c.b16 %v854, %v850
    %v1067 = vpack.c.b16 %v859, %v855
    %v1068 = vpack.c.b16 %v860, %v856
    %v1069 = vpack.c.b16 %v861, %v857
    %v1070 = vpack.c.b16 %v862, %v858
    %v1071 = vpack.c.b16 %v867, %v863
    %v1072 = vpack.c.b16 %v868, %v864
    %v1073 = vpack.c.b16 %v869, %v865
    %v1074 = vpack.c.b16 %v870, %v866
    %v1075 = vpack.c.b16 %v875, %v871
    %v1076 = vpack.c.b16 %v876, %v872
    %v1077 = vpack.c.b16 %v877, %v873
    %v1078 = vpack.c.b16 %v878, %v874
    %v1079 = vpack.c.b16 %v883, %v879
    %v1080 = vpack.c.b16 %v884, %v880
    %v1081 = vpack.c.b16 %v885, %v881
    %v1082 = vpack.c.b16 %v886, %v882
    %vm1279 = vcmask 130048
    %v1281 = vsel %vm1279, %v80, 0
    %1283 = vmatprep.subr.bf16.mxu0 %v888
    %1284 = vmatpush1.bf16.msra.mxu0 %v887
    %1285 = vmatprep.subr.bf16.mxu0 %v892
    %1286 = vmatpush1.bf16.msra.mxu0 %v891
    %1287 = vmatprep.subr.bf16.mxu0 %v896
    %1288 = vmatpush1.bf16.msra.mxu0 %v895
    %1289 = vmatprep.subr.bf16.mxu0 %v900
    %1290 = vmatpush1.bf16.msra.mxu0 %v899
    %1291 = vmatprep.subr.bf16.mxu0 %v904
    %1292 = vmatpush1.bf16.msra.mxu0 %v903
    %1293 = vmatprep.subr.bf16.mxu0 %v908
    %1294 = vmatpush1.bf16.msra.mxu0 %v907
    %1295 = vmatprep.subr.bf16.mxu0 %v912
    %1296 = vmatpush1.bf16.msra.mxu0 %v911
    %1297 = vmatprep.subr.bf16.mxu0 %v916
    %1298 = vmatpush1.bf16.msra.mxu0 %v915
    %1299 = vmatprep.subr.bf16.mxu0 %v920
    %1300 = vmatpush1.bf16.msra.mxu0 %v919
    %1301 = vmatprep.subr.bf16.mxu0 %v924
    %1302 = vmatpush1.bf16.msra.mxu0 %v923
    %1303 = vmatprep.subr.bf16.mxu0 %v928
    %1304 = vmatpush1.bf16.msra.mxu0 %v927
    %1305 = vmatprep.subr.bf16.mxu0 %v932
    %1306 = vmatpush1.bf16.msra.mxu0 %v931
    %1307 = vmatprep.subr.bf16.mxu0 %v936
    %1308 = vmatpush1.bf16.msra.mxu0 %v935
    %1309 = vmatprep.subr.bf16.mxu0 %v940
    %1310 = vmatpush1.bf16.msra.mxu0 %v939
    %1311 = vmatprep.subr.bf16.mxu0 %v944
    %1312 = vmatpush1.bf16.msra.mxu0 %v943
    %1313 = vmatprep.subr.bf16.mxu0 %v948
    %1314 = vmatpush1.bf16.msra.mxu0 %v947
    %1315 = vmatprep.mubr.bf16.mxu0 %v75
    %1316 = vmatmul.mubr.bf16.gmra.mrb[0].mxu0 %v74
    %v1317 = vpop.f32.mrb[0].mxu0
    %v1318 = vadd.f32 %v282, %v1317
    %v1319 = vpop.f32.mrb[0].mxu0
    %v1320 = vadd.f32 %v286, %v1319
    %v1321 = vpop.f32.mrb[0].mxu0
    %v1322 = vpop.f32.mrb[0].mxu0
    %1323 = vdwg.mxu0
    %1324 = vmatprep.subr.bf16.mxu0 %v952
    %1325 = vmatpush1.bf16.msra.mxu0 %v951
    %1326 = vmatprep.subr.bf16.mxu0 %v956
    %1327 = vmatpush1.bf16.msra.mxu0 %v955
    %1328 = vmatprep.subr.bf16.mxu0 %v960
    %1329 = vmatpush1.bf16.msra.mxu0 %v959
    %1330 = vmatprep.subr.bf16.mxu0 %v964
    %1331 = vmatpush1.bf16.msra.mxu0 %v963
    %1332 = vmatprep.subr.bf16.mxu0 %v968
    %1333 = vmatpush1.bf16.msra.mxu0 %v967
    %1334 = vmatprep.subr.bf16.mxu0 %v972
    %1335 = vmatpush1.bf16.msra.mxu0 %v971
    %1336 = vmatprep.subr.bf16.mxu0 %v976
    %1337 = vmatpush1.bf16.msra.mxu0 %v975
    %1338 = vmatprep.subr.bf16.mxu0 %v980
    %1339 = vmatpush1.bf16.msra.mxu0 %v979
    %1340 = vmatprep.subr.bf16.mxu0 %v984
    %1341 = vmatpush1.bf16.msra.mxu0 %v983
    %1342 = vmatprep.subr.bf16.mxu0 %v988
    %1343 = vmatpush1.bf16.msra.mxu0 %v987
    %1344 = vmatprep.subr.bf16.mxu0 %v992
    %1345 = vmatpush1.bf16.msra.mxu0 %v991
    %1346 = vmatprep.subr.bf16.mxu0 %v996
    %1347 = vmatpush1.bf16.msra.mxu0 %v995
    %1348 = vmatprep.subr.bf16.mxu0 %v1000
    %1349 = vmatpush1.bf16.msra.mxu0 %v999
    %1350 = vmatprep.subr.bf16.mxu0 %v1004
    %1351 = vmatpush1.bf16.msra.mxu0 %v1003
    %1352 = vmatprep.subr.bf16.mxu0 %v1008
    %1353 = vmatpush1.bf16.msra.mxu0 %v1007
    %1354 = vmatprep.subr.bf16.mxu0 %v1012
    %1355 = vmatpush1.bf16.msra.mxu0 %v1011
    %1356 = vmatprep.mubr.bf16.mxu0 %v77
    %1357 = vmatmul.mubr.bf16.gmra.mrb[0].mxu0 %v76
    %v1358 = vpop.f32.mrb[0].mxu0
    %v1359 = vadd.f32 %v1318, %v1358
    %v1360 = vpop.f32.mrb[0].mxu0
    %v1361 = vadd.f32 %v1320, %v1360
    %v1362 = vpop.f32.mrb[0].mxu0
    %v1363 = vpop.f32.mrb[0].mxu0
    %1364 = vdwg.mxu0
    %1365 = vmatprep.subr.bf16.mxu0 %v1016
    %1366 = vmatpush1.bf16.msra.mxu0 %v1015
    %1367 = vmatprep.subr.bf16.mxu0 %v1020
    %1368 = vmatpush1.bf16.msra.mxu0 %v1019
    %1369 = vmatprep.subr.bf16.mxu0 %v1024
    %1370 = vmatpush1.bf16.msra.mxu0 %v1023
    %1371 = vmatprep.subr.bf16.mxu0 %v1028
    %1372 = vmatpush1.bf16.msra.mxu0 %v1027
    %1373 = vmatprep.subr.bf16.mxu0 %v1032
    %1374 = vmatpush1.bf16.msra.mxu0 %v1031
    %1375 = vmatprep.subr.bf16.mxu0 %v1036
    %1376 = vmatpush1.bf16.msra.mxu0 %v1035
    %1377 = vmatprep.subr.bf16.mxu0 %v1040
    %1378 = vmatpush1.bf16.msra.mxu0 %v1039
    %1379 = vmatprep.subr.bf16.mxu0 %v1044
    %1380 = vmatpush1.bf16.msra.mxu0 %v1043
    %1381 = vmatprep.subr.bf16.mxu0 %v1048
    %1382 = vmatpush1.bf16.msra.mxu0 %v1047
    %1383 = vmatprep.subr.bf16.mxu0 %v1052
    %1384 = vmatpush1.bf16.msra.mxu0 %v1051
    %1385 = vmatprep.subr.bf16.mxu0 %v1056
    %1386 = vmatpush1.bf16.msra.mxu0 %v1055
    %1387 = vmatprep.subr.bf16.mxu0 %v1060
    %1388 = vmatpush1.bf16.msra.mxu0 %v1059
    %1389 = vmatprep.subr.bf16.mxu0 %v1064
    %1390 = vmatpush1.bf16.msra.mxu0 %v1063
    %1391 = vmatprep.subr.bf16.mxu0 %v1068
    %1392 = vmatpush1.bf16.msra.mxu0 %v1067
    %1393 = vmatprep.subr.bf16.mxu0 %v1072
    %1394 = vmatpush1.bf16.msra.mxu0 %v1071
    %1395 = vmatprep.subr.bf16.mxu0 %v1076
    %1396 = vmatpush1.bf16.msra.mxu0 %v1075
    %1397 = vmatprep.mubr.bf16.mxu0 %v79
    %1398 = vmatmul.mubr.bf16.gmra.mrb[0].mxu0 %v78
    %v1399 = vpop.f32.mrb[0].mxu0
    %v1400 = vadd.f32 %v1359, %v1399
    %v1401 = vpop.f32.mrb[0].mxu0
    %v1402 = vadd.f32 %v1361, %v1401
    %v1403 = vpop.f32.mrb[0].mxu0
    %v1404 = vpop.f32.mrb[0].mxu0
    %1405 = vdwg.mxu0
    %1406 = vmatprep.subr.bf16.mxu0 %v1080
    %1407 = vmatpush1.bf16.msra.mxu0 %v1079
    %1408 = vmatprep.subr.bf16.mxu0 0
    %1409 = vmatpush1.bf16.msra.mxu0 0
    %1410 = vmatprep.subr.bf16.mxu0 0
    %1411 = vmatpush1.bf16.msra.mxu0 0
    %1412 = vmatprep.subr.bf16.mxu0 0
    %1413 = vmatpush1.bf16.msra.mxu0 0
    %1414 = vmatprep.subr.bf16.mxu0 0
    %1415 = vmatpush1.bf16.msra.mxu0 0
    %1416 = vmatprep.subr.bf16.mxu0 0
    %1417 = vmatpush1.bf16.msra.mxu0 0
    %1418 = vmatprep.subr.bf16.mxu0 0
    %1419 = vmatpush1.bf16.msra.mxu0 0
    %1420 = vmatprep.subr.bf16.mxu0 0
    %1421 = vmatpush1.bf16.msra.mxu0 0
    %1422 = vmatprep.subr.bf16.mxu0 0
    %1423 = vmatpush1.bf16.msra.mxu0 0
    %1424 = vmatprep.subr.bf16.mxu0 0
    %1425 = vmatpush1.bf16.msra.mxu0 0
    %1426 = vmatprep.subr.bf16.mxu0 0
    %1427 = vmatpush1.bf16.msra.mxu0 0
    %1428 = vmatprep.subr.bf16.mxu0 0
    %1429 = vmatpush1.bf16.msra.mxu0 0
    %1430 = vmatprep.subr.bf16.mxu0 0
    %1431 = vmatpush1.bf16.msra.mxu0 0
    %1432 = vmatprep.subr.bf16.mxu0 0
    %1433 = vmatpush1.bf16.msra.mxu0 0
    %1434 = vmatprep.subr.bf16.mxu0 0
    %1435 = vmatpush1.bf16.msra.mxu0 0
    %1436 = vmatprep.subr.bf16.mxu0 0
    %1437 = vmatpush1.bf16.msra.mxu0 0
    %1438 = vmatprep.mubr.bf16.mxu0 0
    %1439 = vmatmul.mubr.bf16.gmra.mrb[0].mxu0 %v1281
    %v1440 = vpop.f32.mrb[0].mxu0
    %v1441 = vadd.f32 %v1400, %v1440
    %v1442 = vpop.f32.mrb[0].mxu0
    %v1443 = vadd.f32 %v1402, %v1442
    %v1444 = vpop.f32.mrb[0].mxu0
    %v1445 = vpop.f32.mrb[0].mxu0
    %1446 = vdwg.mxu0
    %1447 = vmatprep.subr.bf16.mxu0 %v890
    %1448 = vmatpush1.bf16.msra.mxu0 %v889
    %1449 = vmatprep.subr.bf16.mxu0 %v894
    %1450 = vmatpush1.bf16.msra.mxu0 %v893
    %1451 = vmatprep.subr.bf16.mxu0 %v898
    %1452 = vmatpush1.bf16.msra.mxu0 %v897
    %1453 = vmatprep.subr.bf16.mxu0 %v902
    %1454 = vmatpush1.bf16.msra.mxu0 %v901
    %1455 = vmatprep.subr.bf16.mxu0 %v906
    %1456 = vmatpush1.bf16.msra.mxu0 %v905
    %1457 = vmatprep.subr.bf16.mxu0 %v910
    %1458 = vmatpush1.bf16.msra.mxu0 %v909
    %1459 = vmatprep.subr.bf16.mxu0 %v914
    %1460 = vmatpush1.bf16.msra.mxu0 %v913
    %1461 = vmatprep.subr.bf16.mxu0 %v918
    %1462 = vmatpush1.bf16.msra.mxu0 %v917
    %1463 = vmatprep.subr.bf16.mxu0 %v922
    %1464 = vmatpush1.bf16.msra.mxu0 %v921
    %1465 = vmatprep.subr.bf16.mxu0 %v926
    %1466 = vmatpush1.bf16.msra.mxu0 %v925
    %1467 = vmatprep.subr.bf16.mxu0 %v930
    %1468 = vmatpush1.bf16.msra.mxu0 %v929
    %1469 = vmatprep.subr.bf16.mxu0 %v934
    %1470 = vmatpush1.bf16.msra.mxu0 %v933
    %1471 = vmatprep.subr.bf16.mxu0 %v938
    %1472 = vmatpush1.bf16.msra.mxu0 %v937
    %1473 = vmatprep.subr.bf16.mxu0 %v942
    %1474 = vmatpush1.bf16.msra.mxu0 %v941
    %1475 = vmatprep.subr.bf16.mxu0 %v946
    %1476 = vmatpush1.bf16.msra.mxu0 %v945
    %1477 = vmatprep.subr.bf16.mxu0 %v950
    %1478 = vmatpush1.bf16.msra.mxu0 %v949
    %1479 = vmatprep.mubr.bf16.mxu0 %v75
    %1480 = vmatmul.mubr.bf16.gmra.mrb[0].mxu0 %v74
    %v1481 = vpop.f32.mrb[0].mxu0
    %v1482 = vadd.f32 %v290, %v1481
    %v1483 = vpop.f32.mrb[0].mxu0
    %v1484 = vadd.f32 %v294, %v1483
    %v1485 = vpop.f32.mrb[0].mxu0
    %v1486 = vpop.f32.mrb[0].mxu0
    %1487 = vdwg.mxu0
    %1488 = vmatprep.subr.bf16.mxu0 %v954
    %1489 = vmatpush1.bf16.msra.mxu0 %v953
    %1490 = vmatprep.subr.bf16.mxu0 %v958
    %1491 = vmatpush1.bf16.msra.mxu0 %v957
    %1492 = vmatprep.subr.bf16.mxu0 %v962
    %1493 = vmatpush1.bf16.msra.mxu0 %v961
    %1494 = vmatprep.subr.bf16.mxu0 %v966
    %1495 = vmatpush1.bf16.msra.mxu0 %v965
    %1496 = vmatprep.subr.bf16.mxu0 %v970
    %1497 = vmatpush1.bf16.msra.mxu0 %v969
    %1498 = vmatprep.subr.bf16.mxu0 %v974
    %1499 = vmatpush1.bf16.msra.mxu0 %v973
    %1500 = vmatprep.subr.bf16.mxu0 %v978
    %1501 = vmatpush1.bf16.msra.mxu0 %v977
    %1502 = vmatprep.subr.bf16.mxu0 %v982
    %1503 = vmatpush1.bf16.msra.mxu0 %v981
    %1504 = vmatprep.subr.bf16.mxu0 %v986
    %1505 = vmatpush1.bf16.msra.mxu0 %v985
    %1506 = vmatprep.subr.bf16.mxu0 %v990
    %1507 = vmatpush1.bf16.msra.mxu0 %v989
    %1508 = vmatprep.subr.bf16.mxu0 %v994
    %1509 = vmatpush1.bf16.msra.mxu0 %v993
    %1510 = vmatprep.subr.bf16.mxu0 %v998
    %1511 = vmatpush1.bf16.msra.mxu0 %v997
    %1512 = vmatprep.subr.bf16.mxu0 %v1002
    %1513 = vmatpush1.bf16.msra.mxu0 %v1001
    %1514 = vmatprep.subr.bf16.mxu0 %v1006
    %1515 = vmatpush1.bf16.msra.mxu0 %v1005
    %1516 = vmatprep.subr.bf16.mxu0 %v1010
    %1517 = vmatpush1.bf16.msra.mxu0 %v1009
    %1518 = vmatprep.subr.bf16.mxu0 %v1014
    %1519 = vmatpush1.bf16.msra.mxu0 %v1013
    %1520 = vmatprep.mubr.bf16.mxu0 %v77
    %1521 = vmatmul.mubr.bf16.gmra.mrb[0].mxu0 %v76
    %v1522 = vpop.f32.mrb[0].mxu0
    %v1523 = vadd.f32 %v1482, %v1522
    %v1524 = vpop.f32.mrb[0].mxu0
    %v1525 = vadd.f32 %v1484, %v1524
    %v1526 = vpop.f32.mrb[0].mxu0
    %v1527 = vpop.f32.mrb[0].mxu0
    %1528 = vdwg.mxu0
    %1529 = vmatprep.subr.bf16.mxu0 %v1018
    %1530 = vmatpush1.bf16.msra.mxu0 %v1017
    %1531 = vmatprep.subr.bf16.mxu0 %v1022
    %1532 = vmatpush1.bf16.msra.mxu0 %v1021
    %1533 = vmatprep.subr.bf16.mxu0 %v1026
    %1534 = vmatpush1.bf16.msra.mxu0 %v1025
    %1535 = vmatprep.subr.bf16.mxu0 %v1030
    %1536 = vmatpush1.bf16.msra.mxu0 %v1029
    %1537 = vmatprep.subr.bf16.mxu0 %v1034
    %1538 = vmatpush1.bf16.msra.mxu0 %v1033
    %1539 = vmatprep.subr.bf16.mxu0 %v1038
    %1540 = vmatpush1.bf16.msra.mxu0 %v1037
    %1541 = vmatprep.subr.bf16.mxu0 %v1042
    %1542 = vmatpush1.bf16.msra.mxu0 %v1041
    %1543 = vmatprep.subr.bf16.mxu0 %v1046
    %1544 = vmatpush1.bf16.msra.mxu0 %v1045
    %1545 = vmatprep.subr.bf16.mxu0 %v1050
    %1546 = vmatpush1.bf16.msra.mxu0 %v1049
    %1547 = vmatprep.subr.bf16.mxu0 %v1054
    %1548 = vmatpush1.bf16.msra.mxu0 %v1053
    %1549 = vmatprep.subr.bf16.mxu0 %v1058
    %1550 = vmatpush1.bf16.msra.mxu0 %v1057
    %1551 = vmatprep.subr.bf16.mxu0 %v1062
    %1552 = vmatpush1.bf16.msra.mxu0 %v1061
    %1553 = vmatprep.subr.bf16.mxu0 %v1066
    %1554 = vmatpush1.bf16.msra.mxu0 %v1065
    %1555 = vmatprep.subr.bf16.mxu0 %v1070
    %1556 = vmatpush1.bf16.msra.mxu0 %v1069
    %1557 = vmatprep.subr.bf16.mxu0 %v1074
    %1558 = vmatpush1.bf16.msra.mxu0 %v1073
    %1559 = vmatprep.subr.bf16.mxu0 %v1078
    %1560 = vmatpush1.bf16.msra.mxu0 %v1077
    %1561 = vmatprep.mubr.bf16.mxu0 %v79
    %1562 = vmatmul.mubr.bf16.gmra.mrb[0].mxu0 %v78
    %v1563 = vpop.f32.mrb[0].mxu0
    %v1564 = vadd.f32 %v1523, %v1563
    %v1565 = vpop.f32.mrb[0].mxu0
    %v1566 = vadd.f32 %v1525, %v1565
    %v1567 = vpop.f32.mrb[0].mxu0
    %v1568 = vpop.f32.mrb[0].mxu0
    %1569 = vdwg.mxu0
    %1570 = vmatprep.subr.bf16.mxu0 %v1082
    %1571 = vmatpush1.bf16.msra.mxu0 %v1081
    %1572 = vmatprep.subr.bf16.mxu0 0
    %1573 = vmatpush1.bf16.msra.mxu0 0
    %1574 = vmatprep.subr.bf16.mxu0 0
    %1575 = vmatpush1.bf16.msra.mxu0 0
    %1576 = vmatprep.subr.bf16.mxu0 0
    %1577 = vmatpush1.bf16.msra.mxu0 0
    %1578 = vmatprep.subr.bf16.mxu0 0
    %1579 = vmatpush1.bf16.msra.mxu0 0
    %1580 = vmatprep.subr.bf16.mxu0 0
    %1581 = vmatpush1.bf16.msra.mxu0 0
    %1582 = vmatprep.subr.bf16.mxu0 0
    %1583 = vmatpush1.bf16.msra.mxu0 0
    %1584 = vmatprep.subr.bf16.mxu0 0
    %1585 = vmatpush1.bf16.msra.mxu0 0
    %1586 = vmatprep.subr.bf16.mxu0 0
    %1587 = vmatpush1.bf16.msra.mxu0 0
    %1588 = vmatprep.subr.bf16.mxu0 0
    %1589 = vmatpush1.bf16.msra.mxu0 0
    %1590 = vmatprep.subr.bf16.mxu0 0
    %1591 = vmatpush1.bf16.msra.mxu0 0
    %1592 = vmatprep.subr.bf16.mxu0 0
    %1593 = vmatpush1.bf16.msra.mxu0 0
    %1594 = vmatprep.subr.bf16.mxu0 0
    %1595 = vmatpush1.bf16.msra.mxu0 0
    %1596 = vmatprep.subr.bf16.mxu0 0
    %1597 = vmatpush1.bf16.msra.mxu0 0
    %1598 = vmatprep.subr.bf16.mxu0 0
    %1599 = vmatpush1.bf16.msra.mxu0 0
    %1600 = vmatprep.subr.bf16.mxu0 0
    %1601 = vmatpush1.bf16.msra.mxu0 0
    %1602 = vmatprep.mubr.bf16.mxu0 0
    %1603 = vmatmul.mubr.bf16.gmra.mrb[0].mxu0 %v1281
    %v1604 = vpop.f32.mrb[0].mxu0
    %v1605 = vadd.f32 %v1564, %v1604
    %v1606 = vpop.f32.mrb[0].mxu0
    %v1607 = vadd.f32 %v1566, %v1606
    %v1608 = vpop.f32.mrb[0].mxu0
    %v1609 = vpop.f32.mrb[0].mxu0
    %1610 = vdwg.mxu0
    %vm1611 = vcmp.gt.f32.partialorder %v1441, 0.0
    %vm1612 = vcmp.gt.f32.partialorder %v1443, 0.0
    %vm1613 = vcmp.gt.f32.partialorder %v1605, 0.0
    %vm1614 = vcmp.gt.f32.partialorder %v1607, 0.0
    %v1615 = vmul.f32 %v1441, 0.2
    %v1616 = vmul.f32 %v1443, 0.2
    %v1617 = vmul.f32 %v1605, 0.2
    %v1618 = vmul.f32 %v1607, 0.2
    %v1619 = vsel %vm1611, %v1441, %v1615
    %v1620 = vsel %vm1612, %v1443, %v1616
    %v1621 = vsel %vm1613, %v1605, %v1617
    %v1622 = vsel %vm1614, %v1607, %v1618
    %v1623 = vpack.c.bf16 %v1619, %v1619
    %v1624 = vpack.c.bf16 %v1620, %v1620
    %v1625 = vpack.c.bf16 %v1621, %v1621
    %v1626 = vpack.c.bf16 %v1622, %v1622
    %v1627 = vld [vmem:[#allocation7] sm:$0xff]
    %v1628 = vld [vmem:[#allocation7 + $0x8] sm:$0xff]
    %v1629 = vld [vmem:[#allocation7 + $0x10] sm:$0xff]
    %v1630 = vld [vmem:[#allocation7 + $0x18] sm:$0xff]
    %v1631 = vld [vmem:[#allocation7 + $0x20] sm:$0xff]
    %v1632 = vld [vmem:[#allocation7 + $0x28] sm:$0xff]
    %v1633 = vld [vmem:[#allocation7 + $0x30] sm:$0xff]
    %v1634 = vld [vmem:[#allocation7 + $0x38] sm:$0xff]
    %v1635 = vld [vmem:[#allocation7 + $0x40] sm:$0xff]
    %v1636 = vld [vmem:[#allocation7 + $0x48] sm:$0xff]
    %v1637 = vld [vmem:[#allocation7 + $0x50] sm:$0xff]
    %v1638 = vld [vmem:[#allocation7 + $0x58] sm:$0xff]
    %v1639 = vld [vmem:[#allocation7 + $0x60] sm:$0xff]
    %v1640 = vld [vmem:[#allocation7 + $0x68] sm:$0xff]
    %v1641 = vld [vmem:[#allocation7 + $0x70] sm:$0xff]
    %v1642 = vld [vmem:[#allocation7 + $0x78] sm:$0xff]
    %v1643 = vld [vmem:[#allocation7 + $0x80] sm:$0xff]
    %v1644 = vld [vmem:[#allocation7 + $0x88] sm:$0xff]
    %v1645 = vld [vmem:[#allocation7 + $0x90] sm:$0xff]
    %v1646 = vld [vmem:[#allocation7 + $0x98] sm:$0xff]
    %v1647 = vld [vmem:[#allocation7 + $0xa0] sm:$0xff]
    %v1648 = vld [vmem:[#allocation7 + $0xa8] sm:$0xff]
    %v1649 = vld [vmem:[#allocation7 + $0xb0] sm:$0xff]
    %v1650 = vld [vmem:[#allocation7 + $0xb8] sm:$0xff]
    %v1651 = vld [vmem:[#allocation7 + $0xc0] sm:$0xff]
    %v1652 = vld [vmem:[#allocation7 + $0xc8] sm:$0xff]
    %v1653 = vld [vmem:[#allocation7 + $0xd0] sm:$0xff]
    %v1654 = vld [vmem:[#allocation7 + $0xd8] sm:$0xff]
    %v1655 = vld [vmem:[#allocation7 + $0xe0] sm:$0xff]
    %v1656 = vld [vmem:[#allocation7 + $0xe8] sm:$0xff]
    %v1657 = vld [vmem:[#allocation7 + $0xf0] sm:$0xff]
    %v1658 = vld [vmem:[#allocation7 + $0xf8] sm:$0xff]
    %v1659 = vld [vmem:[#allocation7 + $0x100] sm:$0xff]
    %v1660 = vld [vmem:[#allocation7 + $0x108] sm:$0xff]
    %v1661 = vld [vmem:[#allocation7 + $0x110] sm:$0xff]
    %v1662 = vld [vmem:[#allocation7 + $0x118] sm:$0xff]
    %v1663 = vld [vmem:[#allocation7 + $0x120] sm:$0xff]
    %v1664 = vld [vmem:[#allocation7 + $0x128] sm:$0xff]
    %v1665 = vld [vmem:[#allocation7 + $0x130] sm:$0xff]
    %v1666 = vld [vmem:[#allocation7 + $0x138] sm:$0xff]
    %v1667 = vld [vmem:[#allocation7 + $0x140] sm:$0xff]
    %v1668 = vld [vmem:[#allocation7 + $0x148] sm:$0xff]
    %v1669 = vld [vmem:[#allocation7 + $0x150] sm:$0xff]
    %v1670 = vld [vmem:[#allocation7 + $0x158] sm:$0xff]
    %v1671 = vld [vmem:[#allocation7 + $0x160] sm:$0xff]
    %v1672 = vld [vmem:[#allocation7 + $0x168] sm:$0xff]
    %v1673 = vld [vmem:[#allocation7 + $0x170] sm:$0xff]
    %v1674 = vld [vmem:[#allocation7 + $0x178] sm:$0xff]
    %v1675 = vld [vmem:[#allocation7 + $0x180] sm:$0xff]
    %v1676 = vld [vmem:[#allocation7 + $0x188] sm:$0xff]
    %v1677 = vld [vmem:[#allocation7 + $0x190] sm:$0xff]
    %v1678 = vld [vmem:[#allocation7 + $0x198] sm:$0xff]
    %v1679 = vld [vmem:[#allocation7 + $0x1a0] sm:$0xff]
    %v1680 = vld [vmem:[#allocation7 + $0x1a8] sm:$0xff]
    %v1681 = vld [vmem:[#allocation7 + $0x1b0] sm:$0xff]
    %v1682 = vld [vmem:[#allocation7 + $0x1b8] sm:$0xff]
    %v1683 = vld [vmem:[#allocation7 + $0x1c0] sm:$0xff]
    %v1684 = vld [vmem:[#allocation7 + $0x1c8] sm:$0xff]
    %v1685 = vld [vmem:[#allocation7 + $0x1d0] sm:$0xff]
    %v1686 = vld [vmem:[#allocation7 + $0x1d8] sm:$0xff]
    %v1687 = vld [vmem:[#allocation7 + $0x1e0] sm:$0xff]
    %v1688 = vld [vmem:[#allocation7 + $0x1e8] sm:$0xff]
    %v1689 = vld [vmem:[#allocation7 + $0x1f0] sm:$0xff]
    %v1690 = vld [vmem:[#allocation7 + $0x1f8] sm:$0xff]
    %v1691 = vld [vmem:[%s4] sm:$0x3]
    %v1693 = vlaneseq
    %v1694 = vshrl.u32 %v1693, 7
    %v1695 = vsub.s32 0, %v1694
    %v1696 = vrot.slane %v1691, %v1695
    %v1697 = vlaneseq
    %v1698 = vshrl.u32 %v1697, 7
    %v1699 = vsub.s32 1, %v1698
    %v1700 = vrot.slane %v1691, %v1699
    %v1767 = vunpack.c.l.b16 %v1627
    %v1768 = vunpack.c.h.b16 %v1627
    %v1769 = vunpack.c.l.b16 %v1628
    %v1770 = vunpack.c.h.b16 %v1628
    %v1771 = vunpack.c.l.b16 %v1629
    %v1772 = vunpack.c.h.b16 %v1629
    %v1773 = vunpack.c.l.b16 %v1630
    %v1774 = vunpack.c.h.b16 %v1630
    %v1775 = vunpack.c.l.b16 %v1631
    %v1776 = vunpack.c.h.b16 %v1631
    %v1777 = vunpack.c.l.b16 %v1632
    %v1778 = vunpack.c.h.b16 %v1632
    %v1779 = vunpack.c.l.b16 %v1633
    %v1780 = vunpack.c.h.b16 %v1633
    %v1781 = vunpack.c.l.b16 %v1634
    %v1782 = vunpack.c.h.b16 %v1634
    %v1783 = vunpack.c.l.b16 %v1635
    %v1784 = vunpack.c.h.b16 %v1635
    %v1785 = vunpack.c.l.b16 %v1636
    %v1786 = vunpack.c.h.b16 %v1636
    %v1787 = vunpack.c.l.b16 %v1637
    %v1788 = vunpack.c.h.b16 %v1637
    %v1789 = vunpack.c.l.b16 %v1638
    %v1790 = vunpack.c.h.b16 %v1638
    %v1791 = vunpack.c.l.b16 %v1639
    %v1792 = vunpack.c.h.b16 %v1639
    %v1793 = vunpack.c.l.b16 %v1640
    %v1794 = vunpack.c.h.b16 %v1640
    %v1795 = vunpack.c.l.b16 %v1641
    %v1796 = vunpack.c.h.b16 %v1641
    %v1797 = vunpack.c.l.b16 %v1642
    %v1798 = vunpack.c.h.b16 %v1642
    %v1799 = vunpack.c.l.b16 %v1643
    %v1800 = vunpack.c.h.b16 %v1643
    %v1801 = vunpack.c.l.b16 %v1644
    %v1802 = vunpack.c.h.b16 %v1644
    %v1803 = vunpack.c.l.b16 %v1645
    %v1804 = vunpack.c.h.b16 %v1645
    %v1805 = vunpack.c.l.b16 %v1646
    %v1806 = vunpack.c.h.b16 %v1646
    %v1807 = vunpack.c.l.b16 %v1647
    %v1808 = vunpack.c.h.b16 %v1647
    %v1809 = vunpack.c.l.b16 %v1648
    %v1810 = vunpack.c.h.b16 %v1648
    %v1811 = vunpack.c.l.b16 %v1649
    %v1812 = vunpack.c.h.b16 %v1649
    %v1813 = vunpack.c.l.b16 %v1650
    %v1814 = vunpack.c.h.b16 %v1650
    %v1815 = vunpack.c.l.b16 %v1651
    %v1816 = vunpack.c.h.b16 %v1651
    %v1817 = vunpack.c.l.b16 %v1652
    %v1818 = vunpack.c.h.b16 %v1652
    %v1819 = vunpack.c.l.b16 %v1653
    %v1820 = vunpack.c.h.b16 %v1653
    %v1821 = vunpack.c.l.b16 %v1654
    %v1822 = vunpack.c.h.b16 %v1654
    %v1823 = vunpack.c.l.b16 %v1655
    %v1824 = vunpack.c.h.b16 %v1655
    %v1825 = vunpack.c.l.b16 %v1656
    %v1826 = vunpack.c.h.b16 %v1656
    %v1827 = vunpack.c.l.b16 %v1657
    %v1828 = vunpack.c.h.b16 %v1657
    %v1829 = vunpack.c.l.b16 %v1658
    %v1830 = vunpack.c.h.b16 %v1658
    %v1831 = vunpack.c.l.b16 %v1659
    %v1832 = vunpack.c.h.b16 %v1659
    %v1833 = vunpack.c.l.b16 %v1660
    %v1834 = vunpack.c.h.b16 %v1660
    %v1835 = vunpack.c.l.b16 %v1661
    %v1836 = vunpack.c.h.b16 %v1661
    %v1837 = vunpack.c.l.b16 %v1662
    %v1838 = vunpack.c.h.b16 %v1662
    %v1839 = vunpack.c.l.b16 %v1663
    %v1840 = vunpack.c.h.b16 %v1663
    %v1841 = vunpack.c.l.b16 %v1664
    %v1842 = vunpack.c.h.b16 %v1664
    %v1843 = vunpack.c.l.b16 %v1665
    %v1844 = vunpack.c.h.b16 %v1665
    %v1845 = vunpack.c.l.b16 %v1666
    %v1846 = vunpack.c.h.b16 %v1666
    %v1847 = vunpack.c.l.b16 %v1667
    %v1848 = vunpack.c.h.b16 %v1667
    %v1849 = vunpack.c.l.b16 %v1668
    %v1850 = vunpack.c.h.b16 %v1668
    %v1851 = vunpack.c.l.b16 %v1669
    %v1852 = vunpack.c.h.b16 %v1669
    %v1853 = vunpack.c.l.b16 %v1670
    %v1854 = vunpack.c.h.b16 %v1670
    %v1855 = vunpack.c.l.b16 %v1671
    %v1856 = vunpack.c.h.b16 %v1671
    %v1857 = vunpack.c.l.b16 %v1672
    %v1858 = vunpack.c.h.b16 %v1672
    %v1859 = vunpack.c.l.b16 %v1673
    %v1860 = vunpack.c.h.b16 %v1673
    %v1861 = vunpack.c.l.b16 %v1674
    %v1862 = vunpack.c.h.b16 %v1674
    %v1863 = vunpack.c.l.b16 %v1675
    %v1864 = vunpack.c.h.b16 %v1675
    %v1865 = vunpack.c.l.b16 %v1676
    %v1866 = vunpack.c.h.b16 %v1676
    %v1867 = vunpack.c.l.b16 %v1677
    %v1868 = vunpack.c.h.b16 %v1677
    %v1869 = vunpack.c.l.b16 %v1678
    %v1870 = vunpack.c.h.b16 %v1678
    %v1871 = vunpack.c.l.b16 %v1679
    %v1872 = vunpack.c.h.b16 %v1679
    %v1873 = vunpack.c.l.b16 %v1680
    %v1874 = vunpack.c.h.b16 %v1680
    %v1875 = vunpack.c.l.b16 %v1681
    %v1876 = vunpack.c.h.b16 %v1681
    %v1877 = vunpack.c.l.b16 %v1682
    %v1878 = vunpack.c.h.b16 %v1682
    %v1879 = vunpack.c.l.b16 %v1683
    %v1880 = vunpack.c.h.b16 %v1683
    %v1881 = vunpack.c.l.b16 %v1684
    %v1882 = vunpack.c.h.b16 %v1684
    %v1883 = vunpack.c.l.b16 %v1685
    %v1884 = vunpack.c.h.b16 %v1685
    %v1885 = vunpack.c.l.b16 %v1686
    %v1886 = vunpack.c.h.b16 %v1686
    %v1887 = vunpack.c.l.b16 %v1687
    %v1888 = vunpack.c.h.b16 %v1687
    %v1889 = vunpack.c.l.b16 %v1688
    %v1890 = vunpack.c.h.b16 %v1688
    %v1891 = vunpack.c.l.b16 %v1689
    %v1892 = vunpack.c.h.b16 %v1689
    %v1893 = vunpack.c.l.b16 %v1690
    %v1894 = vunpack.c.h.b16 %v1690
    %v1895 = vpack.c.b16 %v1769, %v1767
    %v1896 = vpack.c.b16 %v1770, %v1768
    %v1897 = vpack.c.b16 %v1773, %v1771
    %v1898 = vpack.c.b16 %v1774, %v1772
    %v1899 = vpack.c.b16 %v1777, %v1775
    %v1900 = vpack.c.b16 %v1778, %v1776
    %v1901 = vpack.c.b16 %v1781, %v1779
    %v1902 = vpack.c.b16 %v1782, %v1780
    %v1903 = vpack.c.b16 %v1785, %v1783
    %v1904 = vpack.c.b16 %v1786, %v1784
    %v1905 = vpack.c.b16 %v1789, %v1787
    %v1906 = vpack.c.b16 %v1790, %v1788
    %v1907 = vpack.c.b16 %v1793, %v1791
    %v1908 = vpack.c.b16 %v1794, %v1792
    %v1909 = vpack.c.b16 %v1797, %v1795
    %v1910 = vpack.c.b16 %v1798, %v1796
    %v1911 = vpack.c.b16 %v1801, %v1799
    %v1912 = vpack.c.b16 %v1802, %v1800
    %v1913 = vpack.c.b16 %v1805, %v1803
    %v1914 = vpack.c.b16 %v1806, %v1804
    %v1915 = vpack.c.b16 %v1809, %v1807
    %v1916 = vpack.c.b16 %v1810, %v1808
    %v1917 = vpack.c.b16 %v1813, %v1811
    %v1918 = vpack.c.b16 %v1814, %v1812
    %v1919 = vpack.c.b16 %v1817, %v1815
    %v1920 = vpack.c.b16 %v1818, %v1816
    %v1921 = vpack.c.b16 %v1821, %v1819
    %v1922 = vpack.c.b16 %v1822, %v1820
    %v1923 = vpack.c.b16 %v1825, %v1823
    %v1924 = vpack.c.b16 %v1826, %v1824
    %v1925 = vpack.c.b16 %v1829, %v1827
    %v1926 = vpack.c.b16 %v1830, %v1828
    %v1927 = vpack.c.b16 %v1833, %v1831
    %v1928 = vpack.c.b16 %v1834, %v1832
    %v1929 = vpack.c.b16 %v1837, %v1835
    %v1930 = vpack.c.b16 %v1838, %v1836
    %v1931 = vpack.c.b16 %v1841, %v1839
    %v1932 = vpack.c.b16 %v1842, %v1840
    %v1933 = vpack.c.b16 %v1845, %v1843
    %v1934 = vpack.c.b16 %v1846, %v1844
    %v1935 = vpack.c.b16 %v1849, %v1847
    %v1936 = vpack.c.b16 %v1850, %v1848
    %v1937 = vpack.c.b16 %v1853, %v1851
    %v1938 = vpack.c.b16 %v1854, %v1852
    %v1939 = vpack.c.b16 %v1857, %v1855
    %v1940 = vpack.c.b16 %v1858, %v1856
    %v1941 = vpack.c.b16 %v1861, %v1859
    %v1942 = vpack.c.b16 %v1862, %v1860
    %v1943 = vpack.c.b16 %v1865, %v1863
    %v1944 = vpack.c.b16 %v1866, %v1864
    %v1945 = vpack.c.b16 %v1869, %v1867
    %v1946 = vpack.c.b16 %v1870, %v1868
    %v1947 = vpack.c.b16 %v1873, %v1871
    %v1948 = vpack.c.b16 %v1874, %v1872
    %v1949 = vpack.c.b16 %v1877, %v1875
    %v1950 = vpack.c.b16 %v1878, %v1876
    %v1951 = vpack.c.b16 %v1881, %v1879
    %v1952 = vpack.c.b16 %v1882, %v1880
    %v1953 = vpack.c.b16 %v1885, %v1883
    %v1954 = vpack.c.b16 %v1886, %v1884
    %v1955 = vpack.c.b16 %v1889, %v1887
    %v1956 = vpack.c.b16 %v1890, %v1888
    %v1957 = vpack.c.b16 %v1893, %v1891
    %v1958 = vpack.c.b16 %v1894, %v1892
    %2023 = vmatprep.subr.bf16.mxu0 %v1896
    %2024 = vmatpush1.bf16.msra.mxu0 %v1895
    %2025 = vmatprep.subr.bf16.mxu0 %v1898
    %2026 = vmatpush1.bf16.msra.mxu0 %v1897
    %2027 = vmatprep.subr.bf16.mxu0 %v1900
    %2028 = vmatpush1.bf16.msra.mxu0 %v1899
    %2029 = vmatprep.subr.bf16.mxu0 %v1902
    %2030 = vmatpush1.bf16.msra.mxu0 %v1901
    %2031 = vmatprep.subr.bf16.mxu0 %v1904
    %2032 = vmatpush1.bf16.msra.mxu0 %v1903
    %2033 = vmatprep.subr.bf16.mxu0 %v1906
    %2034 = vmatpush1.bf16.msra.mxu0 %v1905
    %2035 = vmatprep.subr.bf16.mxu0 %v1908
    %2036 = vmatpush1.bf16.msra.mxu0 %v1907
    %2037 = vmatprep.subr.bf16.mxu0 %v1910
    %2038 = vmatpush1.bf16.msra.mxu0 %v1909
    %2039 = vmatprep.subr.bf16.mxu0 %v1912
    %2040 = vmatpush1.bf16.msra.mxu0 %v1911
    %2041 = vmatprep.subr.bf16.mxu0 %v1914
    %2042 = vmatpush1.bf16.msra.mxu0 %v1913
    %2043 = vmatprep.subr.bf16.mxu0 %v1916
    %2044 = vmatpush1.bf16.msra.mxu0 %v1915
    %2045 = vmatprep.subr.bf16.mxu0 %v1918
    %2046 = vmatpush1.bf16.msra.mxu0 %v1917
    %2047 = vmatprep.subr.bf16.mxu0 %v1920
    %2048 = vmatpush1.bf16.msra.mxu0 %v1919
    %2049 = vmatprep.subr.bf16.mxu0 %v1922
    %2050 = vmatpush1.bf16.msra.mxu0 %v1921
    %2051 = vmatprep.subr.bf16.mxu0 %v1924
    %2052 = vmatpush1.bf16.msra.mxu0 %v1923
    %2053 = vmatprep.subr.bf16.mxu0 %v1926
    %2054 = vmatpush1.bf16.msra.mxu0 %v1925
    %2055 = vmatprep.mubr.bf16.mxu0 %v1624
    %2056 = vmatmul.mubr.bf16.gmra.mrb[0].mxu0 %v1623
    %v2057 = vpop.f32.mrb[0].mxu0
    %v2058 = vadd.f32 %v1696, %v2057
    %v2059 = vpop.f32.mrb[0].mxu0
    %v2060 = vadd.f32 %v1700, %v2059
    %v2061 = vpop.f32.mrb[0].mxu0
    %v2062 = vpop.f32.mrb[0].mxu0
    %2063 = vdwg.mxu0
    %2064 = vmatprep.subr.bf16.mxu0 %v1928
    %2065 = vmatpush1.bf16.msra.mxu0 %v1927
    %2066 = vmatprep.subr.bf16.mxu0 %v1930
    %2067 = vmatpush1.bf16.msra.mxu0 %v1929
    %2068 = vmatprep.subr.bf16.mxu0 %v1932
    %2069 = vmatpush1.bf16.msra.mxu0 %v1931
    %2070 = vmatprep.subr.bf16.mxu0 %v1934
    %2071 = vmatpush1.bf16.msra.mxu0 %v1933
    %2072 = vmatprep.subr.bf16.mxu0 %v1936
    %2073 = vmatpush1.bf16.msra.mxu0 %v1935
    %2074 = vmatprep.subr.bf16.mxu0 %v1938
    %2075 = vmatpush1.bf16.msra.mxu0 %v1937
    %2076 = vmatprep.subr.bf16.mxu0 %v1940
    %2077 = vmatpush1.bf16.msra.mxu0 %v1939
    %2078 = vmatprep.subr.bf16.mxu0 %v1942
    %2079 = vmatpush1.bf16.msra.mxu0 %v1941
    %2080 = vmatprep.subr.bf16.mxu0 %v1944
    %2081 = vmatpush1.bf16.msra.mxu0 %v1943
    %2082 = vmatprep.subr.bf16.mxu0 %v1946
    %2083 = vmatpush1.bf16.msra.mxu0 %v1945
    %2084 = vmatprep.subr.bf16.mxu0 %v1948
    %2085 = vmatpush1.bf16.msra.mxu0 %v1947
    %2086 = vmatprep.subr.bf16.mxu0 %v1950
    %2087 = vmatpush1.bf16.msra.mxu0 %v1949
    %2088 = vmatprep.subr.bf16.mxu0 %v1952
    %2089 = vmatpush1.bf16.msra.mxu0 %v1951
    %2090 = vmatprep.subr.bf16.mxu0 %v1954
    %2091 = vmatpush1.bf16.msra.mxu0 %v1953
    %2092 = vmatprep.subr.bf16.mxu0 %v1956
    %2093 = vmatpush1.bf16.msra.mxu0 %v1955
    %2094 = vmatprep.subr.bf16.mxu0 %v1958
    %2095 = vmatpush1.bf16.msra.mxu0 %v1957
    %2096 = vmatprep.mubr.bf16.mxu0 %v1626
    %2097 = vmatmul.mubr.bf16.gmra.mrb[0].mxu0 %v1625
    %v2098 = vpop.f32.mrb[0].mxu0
    %v2099 = vadd.f32 %v2058, %v2098
    %v2100 = vpop.f32.mrb[0].mxu0
    %v2101 = vadd.f32 %v2060, %v2100
    %v2102 = vpop.f32.mrb[0].mxu0
    %v2103 = vpop.f32.mrb[0].mxu0
    %2104 = vdwg.mxu0
    %vm2105 = vcmp.gt.f32.partialorder %v2099, 0.0
    %vm2106 = vcmp.gt.f32.partialorder %v2101, 0.0
    %v2107 = vmul.f32 %v2099, 0.2
    %v2108 = vmul.f32 %v2101, 0.2
    %v2109 = vsel %vm2105, %v2099, %v2107
    %v2110 = vsel %vm2106, %v2101, %v2108
    %v2111 = vld [vmem:[%s5] sm:$0x3]
    %v2112 = vunpack.c.l.bf16 %v2111
    %v2114 = vlaneseq
    %v2115 = vshrl.u32 %v2114, 7
    %v2116 = vsub.s32 0, %v2115
    %v2117 = vrot.slane %v2112, %v2116
    %v2118 = vlaneseq
    %v2119 = vshrl.u32 %v2118, 7
    %v2120 = vsub.s32 2, %v2119
    %v2121 = vrot.slane %v2112, %v2120
    %v2124 = vlaneseq
    %v2125 = vshrl.u32 %v2124, 7
    %v2126 = vsub.s32 0, %v2125
    %v2127 = vrot.slane %v2117, %v2126
    %v2128 = vlaneseq
    %v2129 = vshrl.u32 %v2128, 7
    %v2130 = vsub.s32 0, %v2129
    %v2131 = vrot.slane %v2121, %v2130
    %v2132 = vmul.f32 %v2109, %v2127
    %v2133 = vmul.f32 %v2110, %v2131
    %v2134 = vadd.f32 %v2132, %v2133
    %2135 = vadd.xlane.f32.xlu0 %v2134
    %v2136 = vpop.xlane.xlu0 %2135
    %s2137 = sld [smem:[#allocation2]]
    %v2138 = vstv %s2137
    %v2139 = vadd.f32 %v2136, %v2138
    %v2140 = vxor.u32 %v2139, 2147483648
    %v2141 = vmul.f32 %v2140, 1.442695
    %v2142 = vpow.pop %v2141
    %v2143 = vadd.f32 %v2142, 1.0
    %v2144 = vrcp.pop %v2143
    %v2145 = vmul.f32 1.0, %v2144
    %vm2146 = vcmask 7168
    %2147 = vst.msk [vmem:[%s7] sm:$0xff] %vm2146, %v2145
    // Predicated region
    $region42: #{tpu_custom_call.1} parent=1 // pred_check
      _
    $region43: #{tpu_custom_call.1} parent=1 // pred_check_branch
      %2149 = sbr.rel (0) target = $region45
    $region44: #{tpu_custom_call.1} parent=1 // pred_region
      _
    $region45: #{tpu_custom_call.1} parent=1 // pred_fallthru
      _
    // Predicated region
    $region46: #{tpu_custom_call.1} parent=1 // pred_check
      _
    $region47: #{tpu_custom_call.1} parent=1 // pred_check_branch
      %2151 = sbr.rel (0) target = $region49
    $region48: #{tpu_custom_call.1} parent=1 // pred_region
      _
    $region49: #{tpu_custom_call.1} parent=1 // pred_fallthru
      _
    %2152 = vsyncpa [#allocation4], 1
    %2153 = vsyncpa [#allocation6], 1

</llo_original>
